<compile_context>
chip_gen: v6e
topology: v6e:2x2x1
jax: 0.10.0
libtpu: 0.0.40
codegen_flags: <defaults>
</compile_context>

<pallas_src>
import functools

import jax
import jax.numpy as jnp
from jax import lax
from jax.experimental import pallas as pl
from jax.experimental.pallas import tpu as pltpu


def _make_caps_kernel(tb, K, w_img, hw, hw_pad, rows):
    """Kernel factory: closes over static tile/geometry parameters."""
    kk_offsets = [ky * w_img + kx for ky in range(K) for kx in range(K)]

    def kernel(w_ref, b_ref, x_ref, o_ref):
        # w_ref: [K*K, rows, C] f32 (resident)   b_ref: [rows, 1] f32 (resident)
        # x_ref: [tb, C, hw_pad] bf16 (streamed) o_ref: [tb, rows, hw] f32
        w_all = w_ref[...]
        bias = b_ref[...]
        for bi in range(tb):
            x_i = x_ref[bi].astype(jnp.float32)          # [C, hw_pad]
            acc = None
            for kk, off in enumerate(kk_offsets):
                xs = x_i[:, off:off + hw]                # shifted window, [C, hw]
                contrib = jnp.dot(w_all[kk], xs,
                                  preferred_element_type=jnp.float32)
                acc = contrib if acc is None else acc + contrib
            o_ref[bi] = (acc + bias).astype(o_ref.dtype)

    return kernel


@functools.partial(
    jax.jit,
    static_argnames=("ch_in", "n_in", "ch_out", "n_out", "K", "batch_tile"))
def capsules_forward(x, wc_full, bc_full, wv_full, bv, *,
                     ch_in, n_in, ch_out, n_out, K=3, batch_tile=8):
    """x: [b, ch_in, n_in, h, w] -> [b, ch_out, n_out, h-K+1, w-K+1] (stride=1, VALID)."""
    b, ci_, ni_, h, w = x.shape
    assert ci_ == ch_in and ni_ == n_in
    h1, w1 = h - K + 1, w - K + 1
    C = ch_in * n_in
    R = ch_out * n_out
    KK = K * K
    HW = h * w
    halo = (K - 1) * w + (K - 1)
    HWp = HW + halo

    # ---- fuse the grouped KxK conv and the 1x1 capsule conv (tiny, done in f32) ----
    wc5 = wc_full.reshape(n_in, ch_out, ch_in, K, K)          # [n, co, ci, ky, kx]
    wv2 = wv_full.reshape(n_out, n_in)                        # [no, n]
    bc2 = bc_full.reshape(n_in, ch_out)                       # [n, co]
    # rows = (co, no); cols = (ci, n)  (matches x's native channel order -> no input transpose)
    w_fused = jnp.einsum("on,ncikl->klcoin", wv2, wc5).reshape(KK, R, C)
    b_fused = (jnp.einsum("on,nc->co", wv2, bc2) + bv[None, :]).reshape(R, 1)

    # ---- stream x directly: [b, ci, n, h, w] -> [b, C, h*w] is a pure reshape.
    # Cast the dominant HBM stream to bf16 and right-pad the flattened spatial
    # axis by the kernel halo so the in-kernel shifted windows stay in bounds.
    x_flat = x.reshape(b, C, HW).astype(jnp.bfloat16)
    x_flat = jnp.pad(x_flat, ((0, 0), (0, 0), (0, halo)))

    # batch tiling: keep >=2 grid steps whenever b >= 2 (v7x megacore sharding).
    tb = min(batch_tile, b)
    if b < 2 * tb:
        tb = max(1, b // 2)
    grid = (pl.cdiv(b, tb),)

    kernel = _make_caps_kernel(tb, K, w, HW, HWp, R)

    out = pl.pallas_call(
        kernel,
        out_shape=jax.ShapeDtypeStruct((b, R, HW), jnp.float32),
        grid_spec=pltpu.PrefetchScalarGridSpec(
            num_scalar_prefetch=0,
            grid=grid,
            in_specs=[
                pl.BlockSpec((KK, R, C), lambda i: (0, 0, 0)),    # resident fused weights
                pl.BlockSpec((R, 1), lambda i: (0, 0)),           # resident fused bias
                pl.BlockSpec((tb, C, HWp), lambda i: (i, 0, 0)),  # streamed input slab
            ],
            out_specs=pl.BlockSpec((tb, R, HW), lambda i: (i, 0, 0)),
        ),
        compiler_params=pltpu.CompilerParams(
            dimension_semantics=("parallel",),
            vmem_limit_bytes=48 * 1024 * 1024,
        ),
    )(w_fused, b_fused, x_flat)

    # [b, R, h*w] -> [b, ch_out, n_out, h, w] is a free reshape; crop to the VALID area.
    out = out.reshape(b, ch_out, n_out, h, w)[:, :, :, :h1, :w1]
    return out


def ref_forward(x, wc_full, bc_full, wv_full, bv, *, ch_in, n_in, ch_out, n_out, K=3):
    """Pure-JAX reference mirroring the PyTorch forward exactly (HIGHEST precision)."""
    b = x.shape[0]
    h, w = x.shape[-2:]
    xp = jnp.transpose(x, (0, 2, 1, 3, 4)).reshape(b, n_in * ch_in, h, w)
    cmap = lax.conv_general_dilated(
        xp, wc_full, window_strides=(1, 1), padding="VALID",
        dimension_numbers=("NCHW", "OIHW", "NCHW"),
        feature_group_count=n_in,
        precision=lax.Precision.HIGHEST) + bc_full[None, :, None, None]
    h1, w1 = cmap.shape[-2:]
    cmap = cmap.reshape(b, n_in, ch_out, h1, w1)
    outs = []
    for i in range(ch_out):
        o = lax.conv_general_dilated(
            cmap[:, :, i], wv_full, (1, 1), "VALID",
            dimension_numbers=("NCHW", "OIHW", "NCHW"),
            precision=lax.Precision.HIGHEST) + bv[None, :, None, None]
        outs.append(o[:, None])
    return jnp.concatenate(outs, axis=1)


if __name__ == "__main__":
    # small, module-consistent shapes: x is [b, ch_in, n_in, h, w]
    # TODO(synk): Network-level glue (BatchNorm3d / ReLU / residual adds, stride-2 /
    # padded variants) is element-wise or minor reshaping left to XLA; this kernel
    # implements the core Capsules1_1v_1_1 forward (KxK stride-1 VALID + 1x1 fuse).
    ch_in, n_in, ch_out, n_out = 4, 8, 4, 8
    b, h, w, K = 2, 16, 16, 3

    key = jax.random.PRNGKey(0)
    k1, k2, k3, k4, k5 = jax.random.split(key, 5)
    x = jax.random.normal(k1, (b, ch_in, n_in, h, w), dtype=jnp.float32)

    # deterministic parameter init (PyTorch-Conv2d-like uniform bounds)
    bound_c = 1.0 / float(ch_in * K * K) ** 0.5
    wc_full = jax.random.uniform(k2, (n_in * ch_out, ch_in, K, K), jnp.float32,
                                 -bound_c, bound_c)
    bc_full = jax.random.uniform(k3, (n_in * ch_out,), jnp.float32, -bound_c, bound_c)
    bound_v = 1.0 / float(n_in) ** 0.5
    wv_full = jax.random.uniform(k4, (n_out, n_in, 1, 1), jnp.float32, -bound_v, bound_v)
    bv = jax.random.uniform(k5, (n_out,), jnp.float32, -bound_v, bound_v)

    out = capsules_forward(x, wc_full, bc_full, wv_full, bv,
                           ch_in=ch_in, n_in=n_in, ch_out=ch_out, n_out=n_out, K=K)
    out = jax.block_until_ready(out)

    ref = ref_forward(x, wc_full, bc_full, wv_full, bv,
                      ch_in=ch_in, n_in=n_in, ch_out=ch_out, n_out=n_out, K=K)

    h1, w1 = h - K + 1, w - K + 1
    assert out.shape == (b, ch_out, n_out, h1, w1), out.shape
    max_err = float(jnp.max(jnp.abs(out - ref)))
    assert jnp.allclose(out, ref, atol=3e-2, rtol=3e-2), max_err
    print("KERNEL_OK")
</pallas_src>

<mosaic_0001>
module attributes {stable_mosaic.version = 11 : i64} {
  func.func @kernel(%arg0: i32, %arg1: memref<9x32x32xf32, #tpu.memory_space<vmem>>, %arg2: memref<32x1xf32, #tpu.memory_space<vmem>>, %arg3: memref<1x32x290xbf16, #tpu.memory_space<vmem>>, %arg4: memref<1x32x256xf32, #tpu.memory_space<vmem>>) attributes {dimension_semantics = [#tpu.dimension_semantics<parallel>], iteration_bounds = array<i64: 2>, scalar_prefetch = 0 : i64, scratch_operands = 0 : i64, tpu.core_type = #tpu.core_type<tc>, window_params = [{pipeline_mode = #tpu.pipeline_mode<synchronous>, transform_indices = @transform_0, window_bounds = array<i64: 9, 32, 32>}, {pipeline_mode = #tpu.pipeline_mode<synchronous>, transform_indices = @transform_1, window_bounds = array<i64: 32, 1>}, {transform_indices = @transform_2, window_bounds = array<i64: 1, 32, 290>}, {transform_indices = @transform_3, window_bounds = array<i64: 1, 32, 256>}]} {
    %c0 = arith.constant 0 : index
    %c0_0 = arith.constant 0 : index
    %c0_1 = arith.constant 0 : index
    %0 = vector.load %arg1[%c0, %c0_0, %c0_1] : memref<9x32x32xf32, #tpu.memory_space<vmem>>, vector<9x32x32xf32>
    %c0_2 = arith.constant 0 : index
    %c0_3 = arith.constant 0 : index
    %1 = vector.load %arg2[%c0_2, %c0_3] : memref<32x1xf32, #tpu.memory_space<vmem>>, vector<32x1xf32>
    %c0_4 = arith.constant 0 : index
    %c0_5 = arith.constant 0 : index
    %c0_6 = arith.constant 0 : index
    %2 = vector.load %arg3[%c0_4, %c0_5, %c0_6] : memref<1x32x290xbf16, #tpu.memory_space<vmem>>, vector<1x32x290xbf16>
    %3 = vector.shape_cast %2 : vector<1x32x290xbf16> to vector<32x290xbf16>
    %4 = arith.extf %3 : vector<32x290xbf16> to vector<32x290xf32>
    %5 = vector.extract_strided_slice %4 {offsets = [0, 0], sizes = [32, 256], strides = [1, 1]} : vector<32x290xf32> to vector<32x256xf32>
    %6 = vector.extract_strided_slice %0 {offsets = [0, 0, 0], sizes = [1, 32, 32], strides = [1, 1, 1]} : vector<9x32x32xf32> to vector<1x32x32xf32>
    %7 = vector.shape_cast %6 : vector<1x32x32xf32> to vector<32x32xf32>
    %cst = arith.constant dense<0.000000e+00> : vector<32x256xf32>
    %8 = tpu.matmul %7, %5, %cst {dimension_numbers = #tpu.dot_dimension_numbers<[1], [0], [0], [1], [0, 0, 1, 1], [], []>} : vector<32x32xf32>, vector<32x256xf32>, vector<32x256xf32> -> vector<32x256xf32>
    %9 = vector.extract_strided_slice %4 {offsets = [0, 1], sizes = [32, 256], strides = [1, 1]} : vector<32x290xf32> to vector<32x256xf32>
    %10 = vector.extract_strided_slice %0 {offsets = [1, 0, 0], sizes = [1, 32, 32], strides = [1, 1, 1]} : vector<9x32x32xf32> to vector<1x32x32xf32>
    %11 = vector.shape_cast %10 : vector<1x32x32xf32> to vector<32x32xf32>
    %cst_7 = arith.constant dense<0.000000e+00> : vector<32x256xf32>
    %12 = tpu.matmul %11, %9, %cst_7 {dimension_numbers = #tpu.dot_dimension_numbers<[1], [0], [0], [1], [0, 0, 1, 1], [], []>} : vector<32x32xf32>, vector<32x256xf32>, vector<32x256xf32> -> vector<32x256xf32>
    %13 = arith.addf %8, %12 : vector<32x256xf32>
    %14 = vector.extract_strided_slice %4 {offsets = [0, 2], sizes = [32, 256], strides = [1, 1]} : vector<32x290xf32> to vector<32x256xf32>
    %15 = vector.extract_strided_slice %0 {offsets = [2, 0, 0], sizes = [1, 32, 32], strides = [1, 1, 1]} : vector<9x32x32xf32> to vector<1x32x32xf32>
    %16 = vector.shape_cast %15 : vector<1x32x32xf32> to vector<32x32xf32>
    %cst_8 = arith.constant dense<0.000000e+00> : vector<32x256xf32>
    %17 = tpu.matmul %16, %14, %cst_8 {dimension_numbers = #tpu.dot_dimension_numbers<[1], [0], [0], [1], [0, 0, 1, 1], [], []>} : vector<32x32xf32>, vector<32x256xf32>, vector<32x256xf32> -> vector<32x256xf32>
    %18 = arith.addf %13, %17 : vector<32x256xf32>
    %19 = vector.extract_strided_slice %4 {offsets = [0, 16], sizes = [32, 256], strides = [1, 1]} : vector<32x290xf32> to vector<32x256xf32>
    %20 = vector.extract_strided_slice %0 {offsets = [3, 0, 0], sizes = [1, 32, 32], strides = [1, 1, 1]} : vector<9x32x32xf32> to vector<1x32x32xf32>
    %21 = vector.shape_cast %20 : vector<1x32x32xf32> to vector<32x32xf32>
    %cst_9 = arith.constant dense<0.000000e+00> : vector<32x256xf32>
    %22 = tpu.matmul %21, %19, %cst_9 {dimension_numbers = #tpu.dot_dimension_numbers<[1], [0], [0], [1], [0, 0, 1, 1], [], []>} : vector<32x32xf32>, vector<32x256xf32>, vector<32x256xf32> -> vector<32x256xf32>
    %23 = arith.addf %18, %22 : vector<32x256xf32>
    %24 = vector.extract_strided_slice %4 {offsets = [0, 17], sizes = [32, 256], strides = [1, 1]} : vector<32x290xf32> to vector<32x256xf32>
    %25 = vector.extract_strided_slice %0 {offsets = [4, 0, 0], sizes = [1, 32, 32], strides = [1, 1, 1]} : vector<9x32x32xf32> to vector<1x32x32xf32>
    %26 = vector.shape_cast %25 : vector<1x32x32xf32> to vector<32x32xf32>
    %cst_10 = arith.constant dense<0.000000e+00> : vector<32x256xf32>
    %27 = tpu.matmul %26, %24, %cst_10 {dimension_numbers = #tpu.dot_dimension_numbers<[1], [0], [0], [1], [0, 0, 1, 1], [], []>} : vector<32x32xf32>, vector<32x256xf32>, vector<32x256xf32> -> vector<32x256xf32>
    %28 = arith.addf %23, %27 : vector<32x256xf32>
    %29 = vector.extract_strided_slice %4 {offsets = [0, 18], sizes = [32, 256], strides = [1, 1]} : vector<32x290xf32> to vector<32x256xf32>
    %30 = vector.extract_strided_slice %0 {offsets = [5, 0, 0], sizes = [1, 32, 32], strides = [1, 1, 1]} : vector<9x32x32xf32> to vector<1x32x32xf32>
    %31 = vector.shape_cast %30 : vector<1x32x32xf32> to vector<32x32xf32>
    %cst_11 = arith.constant dense<0.000000e+00> : vector<32x256xf32>
    %32 = tpu.matmul %31, %29, %cst_11 {dimension_numbers = #tpu.dot_dimension_numbers<[1], [0], [0], [1], [0, 0, 1, 1], [], []>} : vector<32x32xf32>, vector<32x256xf32>, vector<32x256xf32> -> vector<32x256xf32>
    %33 = arith.addf %28, %32 : vector<32x256xf32>
    %34 = vector.extract_strided_slice %4 {offsets = [0, 32], sizes = [32, 256], strides = [1, 1]} : vector<32x290xf32> to vector<32x256xf32>
    %35 = vector.extract_strided_slice %0 {offsets = [6, 0, 0], sizes = [1, 32, 32], strides = [1, 1, 1]} : vector<9x32x32xf32> to vector<1x32x32xf32>
    %36 = vector.shape_cast %35 : vector<1x32x32xf32> to vector<32x32xf32>
    %cst_12 = arith.constant dense<0.000000e+00> : vector<32x256xf32>
    %37 = tpu.matmul %36, %34, %cst_12 {dimension_numbers = #tpu.dot_dimension_numbers<[1], [0], [0], [1], [0, 0, 1, 1], [], []>} : vector<32x32xf32>, vector<32x256xf32>, vector<32x256xf32> -> vector<32x256xf32>
    %38 = arith.addf %33, %37 : vector<32x256xf32>
    %39 = vector.extract_strided_slice %4 {offsets = [0, 33], sizes = [32, 256], strides = [1, 1]} : vector<32x290xf32> to vector<32x256xf32>
    %40 = vector.extract_strided_slice %0 {offsets = [7, 0, 0], sizes = [1, 32, 32], strides = [1, 1, 1]} : vector<9x32x32xf32> to vector<1x32x32xf32>
    %41 = vector.shape_cast %40 : vector<1x32x32xf32> to vector<32x32xf32>
    %cst_13 = arith.constant dense<0.000000e+00> : vector<32x256xf32>
    %42 = tpu.matmul %41, %39, %cst_13 {dimension_numbers = #tpu.dot_dimension_numbers<[1], [0], [0], [1], [0, 0, 1, 1], [], []>} : vector<32x32xf32>, vector<32x256xf32>, vector<32x256xf32> -> vector<32x256xf32>
    %43 = arith.addf %38, %42 : vector<32x256xf32>
    %44 = vector.extract_strided_slice %4 {offsets = [0, 34], sizes = [32, 256], strides = [1, 1]} : vector<32x290xf32> to vector<32x256xf32>
    %45 = vector.extract_strided_slice %0 {offsets = [8, 0, 0], sizes = [1, 32, 32], strides = [1, 1, 1]} : vector<9x32x32xf32> to vector<1x32x32xf32>
    %46 = vector.shape_cast %45 : vector<1x32x32xf32> to vector<32x32xf32>
    %cst_14 = arith.constant dense<0.000000e+00> : vector<32x256xf32>
    %47 = tpu.matmul %46, %44, %cst_14 {dimension_numbers = #tpu.dot_dimension_numbers<[1], [0], [0], [1], [0, 0, 1, 1], [], []>} : vector<32x32xf32>, vector<32x256xf32>, vector<32x256xf32> -> vector<32x256xf32>
    %48 = arith.addf %43, %47 : vector<32x256xf32>
    %49 = vector.broadcast %1 : vector<32x1xf32> to vector<32x256xf32>
    %50 = arith.addf %48, %49 : vector<32x256xf32>
    %c0_15 = arith.constant 0 : index
    %c0_16 = arith.constant 0 : index
    %c0_17 = arith.constant 0 : index
    %51 = vector.load %arg4[%c0_15, %c0_16, %c0_17] : memref<1x32x256xf32, #tpu.memory_space<vmem>>, vector<1x32x256xf32>
    %52 = vector.shape_cast %51 : vector<1x32x256xf32> to vector<32x256xf32>
    %53 = vector.shape_cast %50 : vector<32x256xf32> to vector<1x32x256xf32>
    tpu.vector_store %arg4[%c0_15, %c0_16, %c0_17], %53 {strides = array<i32>} : memref<1x32x256xf32, #tpu.memory_space<vmem>>, vector<1x32x256xf32>,
    return
  }
  func.func @transform_0(%arg0: i32) -> (i32, i32, i32) {
    %c0_i32 = arith.constant 0 : i32
    %c0_i32_0 = arith.constant 0 : i32
    %c0_i32_1 = arith.constant 0 : i32
    %c0_i32_2 = arith.constant 0 : i32
    return %c0_i32, %c0_i32_0, %c0_i32_1 : i32, i32, i32
  }
  func.func @transform_1(%arg0: i32) -> (i32, i32) {
    %c0_i32 = arith.constant 0 : i32
    %c0_i32_0 = arith.constant 0 : i32
    %c0_i32_1 = arith.constant 0 : i32
    return %c0_i32, %c0_i32_0 : i32, i32
  }
  func.func @transform_2(%arg0: i32) -> (i32, i32, i32) {
    %c0_i32 = arith.constant 0 : i32
    %c0_i32_0 = arith.constant 0 : i32
    %c0_i32_1 = arith.constant 0 : i32
    return %arg0, %c0_i32, %c0_i32_0 : i32, i32, i32
  }
  func.func @transform_3(%arg0: i32) -> (i32, i32, i32) {
    %c0_i32 = arith.constant 0 : i32
    %c0_i32_0 = arith.constant 0 : i32
    %c0_i32_1 = arith.constant 0 : i32
    return %arg0, %c0_i32, %c0_i32_0 : i32, i32, i32
  }
}

</mosaic_0001>

<llo_original>
// kernel: capsules_forward.1
$region0: #{capsules_forward.1}
  #allocation0 [shape = 'u32[]', space=smem, size = 0x4, offset = 0x4, fixed_abs, tag = 'smem constant byte address 0x4 - core index']
  #allocation1 [shape = 'u32[144,128]{1,0:T(1,128)}', space=vmem, size = 0x12000, scoped, tag = 'internal scratch']
  %s0 = inlined_call_operand.vmem [shape: f32[9,32,32], index: 0, kind: input, shape index: {}]
  %s1 = inlined_call_operand.vmem [shape: f32[32,1], index: 1, kind: input, shape index: {}]
  %s2 = inlined_call_operand.vmem [shape: bf16[2,32,290], index: 2, kind: input, shape index: {}]
  %s3 = inlined_call_operand.vmem [shape: f32[2,32,256], index: 3, kind: output, shape index: {}]
  %s4 = sld [smem:[#allocation0]]
  $region45: #{capsules_forward.1} parent=0
    _
  %s6 = ssub.s32 1, %s4
  %s7 = scalar_select 0, %s6, %s4
  loop: start=0, step=1, limit=4
  $region2: #{capsules_forward.1} parent=0 // loop_pre_header
    _
  $region3: #{capsules_forward.1} parent=0 // loop_header
    %s9 = sphi 0, %s13
    %p10 = scmp.ge.s32.totalorder %s9, 4
    %s17 = sphi 0, %s17
    %s19 = sphi 0, %s17
    %s20 = sphi 0, %s19
    %s34 = sphi 0, %s20
    %s38 = sphi 0, %s38
    %s40 = sphi 0, %s38
    %s41 = sphi 0, %s40
    %s55 = sphi 0, %s41
    %s61 = sphi 0, %s63
    %s64 = sphi 0, %s61
    %s65 = sphi 0, %s64
    %s81 = sphi 0, %s65
    %s87 = sphi 0, %s89
    %s90 = sphi 0, %s87
    %s91 = sphi 0, %s90
    %s107 = sphi 0, %s91
  $region4: #{capsules_forward.1} parent=0 // loop_header_branch
    %12 = sbr.rel (%p10) target = $region8
  $region5: #{capsules_forward.1} parent=0 // loop_body
    %s14 = ssub.s32 %s9, 1
    %s15 = ssub.s32 %s9, 2
    %s16 = sadd.s32 %s9, 1
    %s18 = sadd.s32 %s17, 1
    %p21 = scmp.eq.s32.totalorder %s9, 1
    %p22 = scmp.ne.s32.totalorder %s17, %s19
    %p23 = scmp.eq.s32.totalorder %s9, 0
    %p24 = por %p22, %p23
    %p25 = scmp.ne.s32.totalorder %s17, %s19
    %p26 = scmp.eq.s32.totalorder %s14, 1
    %p27 = por %p25, %p26
    %p28 = scmp.ne.s32.totalorder %s19, %s20
    %p29 = scmp.eq.s32.totalorder %s14, 0
    %p30 = por %p28, %p29
    %p31 = scmp.ne.s32.totalorder %s19, %s20
    %p32 = scmp.eq.s32.totalorder %s15, 1
    %p33 = por %p31, %p32
    %p35 = scmp.ne.s32.totalorder %s20, %s34
    %p36 = scmp.eq.s32.totalorder %s15, 0
    %p37 = por %p35, %p36
    %s39 = sadd.s32 %s38, 1
    %p42 = scmp.eq.s32.totalorder %s9, 1
    %p43 = scmp.ne.s32.totalorder %s38, %s40
    %p44 = scmp.eq.s32.totalorder %s9, 0
    %p45 = por %p43, %p44
    %p46 = scmp.ne.s32.totalorder %s38, %s40
    %p47 = scmp.eq.s32.totalorder %s14, 1
    %p48 = por %p46, %p47
    %p49 = scmp.ne.s32.totalorder %s40, %s41
    %p50 = scmp.eq.s32.totalorder %s14, 0
    %p51 = por %p49, %p50
    %p52 = scmp.ne.s32.totalorder %s40, %s41
    %p53 = scmp.eq.s32.totalorder %s15, 1
    %p54 = por %p52, %p53
    %p56 = scmp.ne.s32.totalorder %s41, %s55
    %p57 = scmp.eq.s32.totalorder %s15, 0
    %p58 = por %p56, %p57
    %s59 = ssub.s32 %s9, %s16
    %p60 = scmp.eq.s32.totalorder %s59, 0
    %s62 = sadd.s32 %s61, 1
    %s63 = scalar_select %p60, %s61, %s62
    %p66 = pneg %p60
    %p67 = scmp.eq.s32.totalorder %s9, 1
    %p68 = por %p66, %p67
    %p69 = scmp.ne.s32.totalorder %s61, %s64
    %p70 = scmp.eq.s32.totalorder %s9, 0
    %p71 = por %p69, %p70
    %p72 = scmp.ne.s32.totalorder %s61, %s64
    %p73 = scmp.eq.s32.totalorder %s14, 1
    %p74 = por %p72, %p73
    %p75 = scmp.ne.s32.totalorder %s64, %s65
    %p76 = scmp.eq.s32.totalorder %s14, 0
    %p77 = por %p75, %p76
    %p78 = scmp.ne.s32.totalorder %s64, %s65
    %p79 = scmp.eq.s32.totalorder %s15, 1
    %p80 = por %p78, %p79
    %p82 = scmp.ne.s32.totalorder %s65, %s81
    %p83 = scmp.eq.s32.totalorder %s15, 0
    %p84 = por %p82, %p83
    %s85 = ssub.s32 %s9, %s16
    %p86 = scmp.eq.s32.totalorder %s85, 0
    %s88 = sadd.s32 %s87, 1
    %s89 = scalar_select %p86, %s87, %s88
    %p92 = pneg %p86
    %p93 = scmp.eq.s32.totalorder %s9, 1
    %p94 = por %p92, %p93
    %p95 = scmp.ne.s32.totalorder %s87, %s90
    %p96 = scmp.eq.s32.totalorder %s9, 0
    %p97 = por %p95, %p96
    %p98 = scmp.ne.s32.totalorder %s87, %s90
    %p99 = scmp.eq.s32.totalorder %s14, 1
    %p100 = por %p98, %p99
    %p101 = scmp.ne.s32.totalorder %s90, %s91
    %p102 = scmp.eq.s32.totalorder %s14, 0
    %p103 = por %p101, %p102
    %p104 = scmp.ne.s32.totalorder %s90, %s91
    %p105 = scmp.eq.s32.totalorder %s15, 1
    %p106 = por %p104, %p105
    %p108 = scmp.ne.s32.totalorder %s91, %s107
    %p109 = scmp.eq.s32.totalorder %s15, 0
    %p110 = por %p108, %p109
    %p111 = scmp.le.s32.totalorder 1, %s9
    %p112 = scmp.lt.s32.totalorder %s9, 3
    %p113 = pnand %p111, %p112
    %p114 = pneg %p113
    // Predicated region
    $region9: #{capsules_forward.1} parent=5 // pred_check
      _
    $region10: #{capsules_forward.1} parent=5 // pred_check_branch
      %116 = sbr.rel (%p113) target = $region12
    $region11: #{capsules_forward.1} parent=5 // pred_region
      %s117 = ssub.s32 %s9, 1
      // Predicated region
      $region13: #{capsules_forward.1} parent=11 // pred_check
        %p118 = pneg %p30
      $region14: #{capsules_forward.1} parent=11 // pred_check_branch
        %120 = sbr.rel (%p118) target = $region16
      $region15: #{capsules_forward.1} parent=11 // pred_region
        _
      $region16: #{capsules_forward.1} parent=11 // pred_fallthru
        _
      // Predicated region
      $region17: #{capsules_forward.1} parent=11 // pred_check
        %p121 = pneg %p51
      $region18: #{capsules_forward.1} parent=11 // pred_check_branch
        %123 = sbr.rel (%p121) target = $region20
      $region19: #{capsules_forward.1} parent=11 // pred_region
        _
      $region20: #{capsules_forward.1} parent=11 // pred_fallthru
        _
    $region12: #{capsules_forward.1} parent=5 // pred_fallthru
      _
    %p124 = scmp.lt.s32.totalorder %s9, 2
    // Predicated region
    $region21: #{capsules_forward.1} parent=5 // pred_check
      %p125 = pneg %p124
    $region22: #{capsules_forward.1} parent=5 // pred_check_branch
      %127 = sbr.rel (%p125) target = $region24
    $region23: #{capsules_forward.1} parent=5 // pred_region
      // Predicated region
      $region25: #{capsules_forward.1} parent=23 // pred_check
        %p128 = pneg %p71
      $region26: #{capsules_forward.1} parent=23 // pred_check_branch
        %130 = sbr.rel (%p128) target = $region28
      $region27: #{capsules_forward.1} parent=23 // pred_region
        %p131 = scmp.lt.s32.totalorder %s9, 1
        %s132 = scalar_select %p131, %s9, 1
        %s133 = smul.addr %s132, 12
        %s134 = smul.addr %s133, 4
        %s135 = scalar_lea.vmem %s2, %s134
      $region28: #{capsules_forward.1} parent=23 // pred_fallthru
        _
    $region24: #{capsules_forward.1} parent=5 // pred_fallthru
      _
    %p136 = scmp.le.s32.totalorder 1, %s9
    %p137 = scmp.lt.s32.totalorder %s9, 3
    %p138 = pnand %p136, %p137
    %p139 = pneg %p138
    // Predicated region
    $region29: #{capsules_forward.1} parent=5 // pred_check
      _
    $region30: #{capsules_forward.1} parent=5 // pred_check_branch
      %141 = sbr.rel (%p138) target = $region32
    $region31: #{capsules_forward.1} parent=5 // pred_region
      %s142 = ssub.s32 %s9, 1
      %p143 = pneg %p30
      %p144 = pneg %p27
      %p145 = pneg %p51
      %p146 = pneg %p48
      %p147 = scmp.lt.s32.totalorder %s14, 1
      %s148 = scalar_select %p147, %s14, 1
      %s149 = smul.addr %s148, 12
      %s150 = smul.addr %s149, 4
      %s151 = scalar_lea.vmem %s2, %s150
      %p152 = pneg %p77
      %p153 = pneg %p74
      %p154 = pneg %p103
      %p155 = pneg %p100
      %p156 = scmp.lt.s32.totalorder %s14, 1
      %s157 = scalar_select %p156, %s14, 1
      %s158 = smul.addr %s157, 8
      %s159 = smul.addr %s158, 8
      %s160 = scalar_lea.vmem %s3, %s159
      %p161 = scmp.lt.s32.totalorder %s14, 1
      %s162 = scalar_select %p161, %s14, 1
      %s163 = smul.addr %s162, 12
      %s164 = smul.addr %s163, 4
      %s165 = scalar_lea.vmem %s2, %s164
      %p166 = scmp.lt.s32.totalorder %s14, 1
      %s167 = scalar_select %p166, %s14, 1
      %s168 = smul.addr %s167, 8
      %s169 = smul.addr %s168, 8
      %s170 = scalar_lea.vmem %s3, %s169
      %v171 = vld [vmem:[%s0] sm:$0xff]
      %v172 = vld [vmem:[%s0 + $0x8] sm:$0xff]
      %v173 = vld [vmem:[%s0 + $0x10] sm:$0xff]
      %v174 = vld [vmem:[%s0 + $0x18] sm:$0xff]
      %v175 = vld [vmem:[%s0 + $0x20] sm:$0xff]
      %v176 = vld [vmem:[%s0 + $0x28] sm:$0xff]
      %v177 = vld [vmem:[%s0 + $0x30] sm:$0xff]
      %v178 = vld [vmem:[%s0 + $0x38] sm:$0xff]
      %v179 = vld [vmem:[%s0 + $0x40] sm:$0xff]
      %v180 = vld [vmem:[%s0 + $0x48] sm:$0xff]
      %v181 = vld [vmem:[%s0 + $0x50] sm:$0xff]
      %v182 = vld [vmem:[%s0 + $0x58] sm:$0xff]
      %v183 = vld [vmem:[%s0 + $0x60] sm:$0xff]
      %v184 = vld [vmem:[%s0 + $0x68] sm:$0xff]
      %v185 = vld [vmem:[%s0 + $0x70] sm:$0xff]
      %v186 = vld [vmem:[%s0 + $0x78] sm:$0xff]
      %v187 = vld [vmem:[%s0 + $0x80] sm:$0xff]
      %v188 = vld [vmem:[%s0 + $0x88] sm:$0xff]
      %v189 = vld [vmem:[%s0 + $0x90] sm:$0xff]
      %v190 = vld [vmem:[%s0 + $0x98] sm:$0xff]
      %v191 = vld [vmem:[%s0 + $0xa0] sm:$0xff]
      %v192 = vld [vmem:[%s0 + $0xa8] sm:$0xff]
      %v193 = vld [vmem:[%s0 + $0xb0] sm:$0xff]
      %v194 = vld [vmem:[%s0 + $0xb8] sm:$0xff]
      %v195 = vld [vmem:[%s0 + $0xc0] sm:$0xff]
      %v196 = vld [vmem:[%s0 + $0xc8] sm:$0xff]
      %v197 = vld [vmem:[%s0 + $0xd0] sm:$0xff]
      %v198 = vld [vmem:[%s0 + $0xd8] sm:$0xff]
      %v199 = vld [vmem:[%s0 + $0xe0] sm:$0xff]
      %v200 = vld [vmem:[%s0 + $0xe8] sm:$0xff]
      %v201 = vld [vmem:[%s0 + $0xf0] sm:$0xff]
      %v202 = vld [vmem:[%s0 + $0xf8] sm:$0xff]
      %v203 = vld [vmem:[%s0 + $0x100] sm:$0xff]
      %v204 = vld [vmem:[%s0 + $0x108] sm:$0xff]
      %v205 = vld [vmem:[%s0 + $0x110] sm:$0xff]
      %v206 = vld [vmem:[%s0 + $0x118] sm:$0xff]
      %v207 = vld [vmem:[%s1] sm:$0xff]
      %v208 = vld [vmem:[%s1 + $0x8] sm:$0xff]
      %v209 = vld [vmem:[%s1 + $0x10] sm:$0xff]
      %v210 = vld [vmem:[%s1 + $0x18] sm:$0xff]
      %v211 = vld [vmem:[%s165] sm:$0xff]
      %v212 = vld [vmem:[%s165 + $0x8] sm:$0xf]
      %v213 = vld [vmem:[%s165 + $0xc] sm:$0xff]
      %v214 = vld [vmem:[%s165 + $0x14] sm:$0xf]
      %v215 = vld [vmem:[%s165 + $0x18] sm:$0xff]
      %v216 = vld [vmem:[%s165 + $0x20] sm:$0xf]
      %v217 = vld [vmem:[%s165 + $0x24] sm:$0xff]
      %v218 = vld [vmem:[%s165 + $0x2c] sm:$0xf]
      %v219 = vunpack.c.l.bf16 %v211
      %v220 = vunpack.c.h.bf16 %v211
      %v221 = vunpack.c.l.bf16 %v212
      %v222 = vunpack.c.l.bf16 %v213
      %v223 = vunpack.c.h.bf16 %v213
      %v224 = vunpack.c.l.bf16 %v214
      %v225 = vunpack.c.l.bf16 %v215
      %v226 = vunpack.c.h.bf16 %v215
      %v227 = vunpack.c.l.bf16 %v216
      %v228 = vunpack.c.l.bf16 %v217
      %v229 = vunpack.c.h.bf16 %v217
      %v230 = vunpack.c.l.bf16 %v218
      %243 = vrot.lane.b32.xlu0 %v219, 127
      %v244 = vpop.permute.xlu0 %243
      %245 = vrot.lane.b32.xlu0 %v220, 127
      %v246 = vpop.permute.xlu0 %245
      %247 = vrot.lane.b32.xlu0 %v221, 127
      %v248 = vpop.permute.xlu0 %247
      %249 = vrot.lane.b32.xlu0 %v222, 127
      %v250 = vpop.permute.xlu0 %249
      %251 = vrot.lane.b32.xlu0 %v223, 127
      %v252 = vpop.permute.xlu0 %251
      %253 = vrot.lane.b32.xlu0 %v224, 127
      %v254 = vpop.permute.xlu0 %253
      %255 = vrot.lane.b32.xlu0 %v225, 127
      %v256 = vpop.permute.xlu0 %255
      %257 = vrot.lane.b32.xlu0 %v226, 127
      %v258 = vpop.permute.xlu0 %257
      %259 = vrot.lane.b32.xlu0 %v227, 127
      %v260 = vpop.permute.xlu0 %259
      %261 = vrot.lane.b32.xlu0 %v228, 127
      %v262 = vpop.permute.xlu0 %261
      %263 = vrot.lane.b32.xlu0 %v229, 127
      %v264 = vpop.permute.xlu0 %263
      %265 = vrot.lane.b32.xlu0 %v230, 127
      %v266 = vpop.permute.xlu0 %265
      %vm267 = vcmask 1039360
      %v268 = vsel %vm267, %v244, %v246
      %v269 = vsel %vm267, %v246, %v248
      %v270 = vsel %vm267, %v250, %v252
      %v271 = vsel %vm267, %v252, %v254
      %v272 = vsel %vm267, %v256, %v258
      %v273 = vsel %vm267, %v258, %v260
      %v274 = vsel %vm267, %v262, %v264
      %v275 = vsel %vm267, %v264, %v266
      %vm284 = vcmask 261120
      %v286 = vsel %vm284, %v175, 0
      %v289 = vsel %vm284, %v176, 0
      %v292 = vsel %vm284, %v177, 0
      %v295 = vsel %vm284, %v178, 0
      %297 = vmatprep.subr.mxu0 0.0
      %298 = vmatpush1.msra.mxu0 0.0
      %299 = vmatprep.subr.mxu0 0.0
      %300 = vmatpush1.msra.mxu0 0.0
      %301 = vmatprep.subr.mxu0 0.0
      %302 = vmatpush1.msra.mxu0 0.0
      %303 = vmatprep.subr.mxu0 0.0
      %304 = vmatpush1.msra.mxu0 0.0
      %305 = vmatprep.subr.mxu0 0.0
      %306 = vmatpush1.msra.mxu0 0.0
      %307 = vmatprep.subr.mxu0 0.0
      %308 = vmatpush1.msra.mxu0 0.0
      %309 = vmatprep.subr.mxu0 0.0
      %310 = vmatpush1.msra.mxu0 0.0
      %311 = vmatprep.subr.mxu0 0.0
      %312 = vmatpush1.msra.mxu0 0.0
      %313 = vmatprep.subr.mxu0 0.0
      %314 = vmatpush1.msra.mxu0 0.0
      %315 = vmatprep.subr.mxu0 0.0
      %316 = vmatpush1.msra.mxu0 0.0
      %317 = vmatprep.subr.mxu0 0.0
      %318 = vmatpush1.msra.mxu0 0.0
      %319 = vmatprep.subr.mxu0 0.0
      %320 = vmatpush1.msra.mxu0 0.0
      %321 = vmatprep.subr.mxu0 %v275
      %322 = vmatpush1.msra.mxu0 %v274
      %323 = vmatprep.subr.mxu0 %v273
      %324 = vmatpush1.msra.mxu0 %v272
      %325 = vmatprep.subr.mxu0 %v271
      %326 = vmatpush1.msra.mxu0 %v270
      %327 = vmatprep.subr.mxu0 %v269
      %328 = vmatpush1.msra.mxu0 %v268
      %329 = vmatprep.subr.mxu0 0.0
      %330 = vmatpush2.msra.mxu0 0.0
      %331 = vmatprep.subr.mxu0 0.0
      %332 = vmatpush2.msra.mxu0 0.0
      %333 = vmatprep.subr.mxu0 0.0
      %334 = vmatpush2.msra.mxu0 0.0
      %335 = vmatprep.subr.mxu0 0.0
      %336 = vmatpush2.msra.mxu0 0.0
      %337 = vmatprep.subr.mxu0 0.0
      %338 = vmatpush2.msra.mxu0 0.0
      %339 = vmatprep.subr.mxu0 0.0
      %340 = vmatpush2.msra.mxu0 0.0
      %341 = vmatprep.subr.mxu0 0.0
      %342 = vmatpush2.msra.mxu0 0.0
      %343 = vmatprep.subr.mxu0 0.0
      %344 = vmatpush2.msra.mxu0 0.0
      %345 = vmatprep.subr.mxu0 0.0
      %346 = vmatpush2.msra.mxu0 0.0
      %347 = vmatprep.subr.mxu0 0.0
      %348 = vmatpush2.msra.mxu0 0.0
      %349 = vmatprep.subr.mxu0 0.0
      %350 = vmatpush2.msra.mxu0 0.0
      %351 = vmatprep.subr.mxu0 0.0
      %352 = vmatpush2.msra.mxu0 0.0
      %353 = vmatprep.subr.mxu0 0.0
      %354 = vmatpush2.msra.mxu0 0.0
      %355 = vmatprep.subr.mxu0 0.0
      %356 = vmatpush2.msra.mxu0 0.0
      %357 = vmatprep.subr.mxu0 0.0
      %358 = vmatpush2.msra.mxu0 0.0
      %359 = vmatprep.subr.mxu0 0.0
      %360 = vmatpush2.msra.mxu0 0.0
      %361 = vmatprep.mubr.f32.mxu0 0.0
      %362 = vmatmul.mubr.f32.gmra.mxu0 %v286
      %v363 = vpop.f32.mrf.mxu0
      %v364 = vadd.f32 0.0, %v363
      %v365 = vpop.f32.mrf.mxu0
      %v366 = vadd.f32 0.0, %v365
      %367 = vmatprep.mubr.f32.mxu0 0.0
      %368 = vmatmul.mubr.f32.gmra.mxu0 %v289
      %v369 = vpop.f32.mrf.mxu0
      %v370 = vadd.f32 0.0, %v369
      %v371 = vpop.f32.mrf.mxu0
      %v372 = vadd.f32 0.0, %v371
      %373 = vmatprep.mubr.f32.mxu0 0.0
      %374 = vmatmul.mubr.f32.gmra.mxu0 %v292
      %v375 = vpop.f32.mrf.mxu0
      %v376 = vadd.f32 0.0, %v375
      %v377 = vpop.f32.mrf.mxu0
      %v378 = vadd.f32 0.0, %v377
      %379 = vmatprep.mubr.f32.mxu0 0.0
      %380 = vmatmul.mubr.f32.gmra.mxu0 %v295
      %v381 = vpop.f32.mrf.mxu0
      %v382 = vadd.f32 0.0, %v381
      %v383 = vpop.f32.mrf.mxu0
      %v384 = vadd.f32 0.0, %v383
      %385 = vdwg.mxu0
      %v387 = vsel %vm284, %v171, 0
      %v390 = vsel %vm284, %v172, 0
      %v393 = vsel %vm284, %v173, 0
      %v396 = vsel %vm284, %v174, 0
      %398 = vmatprep.subr.mxu0 0.0
      %399 = vmatpush1.msra.mxu0 0.0
      %400 = vmatprep.subr.mxu0 0.0
      %401 = vmatpush1.msra.mxu0 0.0
      %402 = vmatprep.subr.mxu0 0.0
      %403 = vmatpush1.msra.mxu0 0.0
      %404 = vmatprep.subr.mxu0 0.0
      %405 = vmatpush1.msra.mxu0 0.0
      %406 = vmatprep.subr.mxu0 0.0
      %407 = vmatpush1.msra.mxu0 0.0
      %408 = vmatprep.subr.mxu0 0.0
      %409 = vmatpush1.msra.mxu0 0.0
      %410 = vmatprep.subr.mxu0 0.0
      %411 = vmatpush1.msra.mxu0 0.0
      %412 = vmatprep.subr.mxu0 0.0
      %413 = vmatpush1.msra.mxu0 0.0
      %414 = vmatprep.subr.mxu0 0.0
      %415 = vmatpush1.msra.mxu0 0.0
      %416 = vmatprep.subr.mxu0 0.0
      %417 = vmatpush1.msra.mxu0 0.0
      %418 = vmatprep.subr.mxu0 0.0
      %419 = vmatpush1.msra.mxu0 0.0
      %420 = vmatprep.subr.mxu0 0.0
      %421 = vmatpush1.msra.mxu0 0.0
      %422 = vmatprep.subr.mxu0 %v229
      %423 = vmatpush1.msra.mxu0 %v228
      %424 = vmatprep.subr.mxu0 %v226
      %425 = vmatpush1.msra.mxu0 %v225
      %426 = vmatprep.subr.mxu0 %v223
      %427 = vmatpush1.msra.mxu0 %v222
      %428 = vmatprep.subr.mxu0 %v220
      %429 = vmatpush1.msra.mxu0 %v219
      %430 = vmatprep.subr.mxu0 0.0
      %431 = vmatpush2.msra.mxu0 0.0
      %432 = vmatprep.subr.mxu0 0.0
      %433 = vmatpush2.msra.mxu0 0.0
      %434 = vmatprep.subr.mxu0 0.0
      %435 = vmatpush2.msra.mxu0 0.0
      %436 = vmatprep.subr.mxu0 0.0
      %437 = vmatpush2.msra.mxu0 0.0
      %438 = vmatprep.subr.mxu0 0.0
      %439 = vmatpush2.msra.mxu0 0.0
      %440 = vmatprep.subr.mxu0 0.0
      %441 = vmatpush2.msra.mxu0 0.0
      %442 = vmatprep.subr.mxu0 0.0
      %443 = vmatpush2.msra.mxu0 0.0
      %444 = vmatprep.subr.mxu0 0.0
      %445 = vmatpush2.msra.mxu0 0.0
      %446 = vmatprep.subr.mxu0 0.0
      %447 = vmatpush2.msra.mxu0 0.0
      %448 = vmatprep.subr.mxu0 0.0
      %449 = vmatpush2.msra.mxu0 0.0
      %450 = vmatprep.subr.mxu0 0.0
      %451 = vmatpush2.msra.mxu0 0.0
      %452 = vmatprep.subr.mxu0 0.0
      %453 = vmatpush2.msra.mxu0 0.0
      %454 = vmatprep.subr.mxu0 0.0
      %455 = vmatpush2.msra.mxu0 0.0
      %456 = vmatprep.subr.mxu0 0.0
      %457 = vmatpush2.msra.mxu0 0.0
      %458 = vmatprep.subr.mxu0 0.0
      %459 = vmatpush2.msra.mxu0 0.0
      %460 = vmatprep.subr.mxu0 0.0
      %461 = vmatpush2.msra.mxu0 0.0
      %462 = vmatprep.mubr.f32.mxu0 0.0
      %463 = vmatmul.mubr.f32.gmra.mxu0 %v387
      %v464 = vpop.f32.mrf.mxu0
      %v465 = vadd.f32 %v364, %v464
      %v466 = vpop.f32.mrf.mxu0
      %v467 = vadd.f32 %v366, %v466
      %468 = vmatprep.mubr.f32.mxu0 0.0
      %469 = vmatmul.mubr.f32.gmra.mxu0 %v390
      %v470 = vpop.f32.mrf.mxu0
      %v471 = vadd.f32 %v370, %v470
      %v472 = vpop.f32.mrf.mxu0
      %v473 = vadd.f32 %v372, %v472
      %474 = vmatprep.mubr.f32.mxu0 0.0
      %475 = vmatmul.mubr.f32.gmra.mxu0 %v393
      %v476 = vpop.f32.mrf.mxu0
      %v477 = vadd.f32 %v376, %v476
      %v478 = vpop.f32.mrf.mxu0
      %v479 = vadd.f32 %v378, %v478
      %480 = vmatprep.mubr.f32.mxu0 0.0
      %481 = vmatmul.mubr.f32.gmra.mxu0 %v396
      %v482 = vpop.f32.mrf.mxu0
      %v483 = vadd.f32 %v382, %v482
      %v484 = vpop.f32.mrf.mxu0
      %v485 = vadd.f32 %v384, %v484
      %486 = vdwg.mxu0
      %487 = vrot.lane.b32.xlu0 %v219, 126
      %v488 = vpop.permute.xlu0 %487
      %489 = vrot.lane.b32.xlu0 %v220, 126
      %v490 = vpop.permute.xlu0 %489
      %491 = vrot.lane.b32.xlu0 %v221, 126
      %v492 = vpop.permute.xlu0 %491
      %493 = vrot.lane.b32.xlu0 %v222, 126
      %v494 = vpop.permute.xlu0 %493
      %495 = vrot.lane.b32.xlu0 %v223, 126
      %v496 = vpop.permute.xlu0 %495
      %497 = vrot.lane.b32.xlu0 %v224, 126
      %v498 = vpop.permute.xlu0 %497
      %499 = vrot.lane.b32.xlu0 %v225, 126
      %v500 = vpop.permute.xlu0 %499
      %501 = vrot.lane.b32.xlu0 %v226, 126
      %v502 = vpop.permute.xlu0 %501
      %503 = vrot.lane.b32.xlu0 %v227, 126
      %v504 = vpop.permute.xlu0 %503
      %505 = vrot.lane.b32.xlu0 %v228, 126
      %v506 = vpop.permute.xlu0 %505
      %507 = vrot.lane.b32.xlu0 %v229, 126
      %v508 = vpop.permute.xlu0 %507
      %509 = vrot.lane.b32.xlu0 %v230, 126
      %v510 = vpop.permute.xlu0 %509
      %vm511 = vcmask 1031168
      %v512 = vsel %vm511, %v488, %v490
      %v513 = vsel %vm511, %v490, %v492
      %v514 = vsel %vm511, %v494, %v496
      %v515 = vsel %vm511, %v496, %v498
      %v516 = vsel %vm511, %v500, %v502
      %v517 = vsel %vm511, %v502, %v504
      %v518 = vsel %vm511, %v506, %v508
      %v519 = vsel %vm511, %v508, %v510
      %v529 = vsel %vm284, %v179, 0
      %v532 = vsel %vm284, %v180, 0
      %v535 = vsel %vm284, %v181, 0
      %v538 = vsel %vm284, %v182, 0
      %540 = vmatprep.subr.mxu0 0.0
      %541 = vmatpush1.msra.mxu0 0.0
      %542 = vmatprep.subr.mxu0 0.0
      %543 = vmatpush1.msra.mxu0 0.0
      %544 = vmatprep.subr.mxu0 0.0
      %545 = vmatpush1.msra.mxu0 0.0
      %546 = vmatprep.subr.mxu0 0.0
      %547 = vmatpush1.msra.mxu0 0.0
      %548 = vmatprep.subr.mxu0 0.0
      %549 = vmatpush1.msra.mxu0 0.0
      %550 = vmatprep.subr.mxu0 0.0
      %551 = vmatpush1.msra.mxu0 0.0
      %552 = vmatprep.subr.mxu0 0.0
      %553 = vmatpush1.msra.mxu0 0.0
      %554 = vmatprep.subr.mxu0 0.0
      %555 = vmatpush1.msra.mxu0 0.0
      %556 = vmatprep.subr.mxu0 0.0
      %557 = vmatpush1.msra.mxu0 0.0
      %558 = vmatprep.subr.mxu0 0.0
      %559 = vmatpush1.msra.mxu0 0.0
      %560 = vmatprep.subr.mxu0 0.0
      %561 = vmatpush1.msra.mxu0 0.0
      %562 = vmatprep.subr.mxu0 0.0
      %563 = vmatpush1.msra.mxu0 0.0
      %564 = vmatprep.subr.mxu0 %v519
      %565 = vmatpush1.msra.mxu0 %v518
      %566 = vmatprep.subr.mxu0 %v517
      %567 = vmatpush1.msra.mxu0 %v516
      %568 = vmatprep.subr.mxu0 %v515
      %569 = vmatpush1.msra.mxu0 %v514
      %570 = vmatprep.subr.mxu0 %v513
      %571 = vmatpush1.msra.mxu0 %v512
      %572 = vmatprep.subr.mxu0 0.0
      %573 = vmatpush2.msra.mxu0 0.0
      %574 = vmatprep.subr.mxu0 0.0
      %575 = vmatpush2.msra.mxu0 0.0
      %576 = vmatprep.subr.mxu0 0.0
      %577 = vmatpush2.msra.mxu0 0.0
      %578 = vmatprep.subr.mxu0 0.0
      %579 = vmatpush2.msra.mxu0 0.0
      %580 = vmatprep.subr.mxu0 0.0
      %581 = vmatpush2.msra.mxu0 0.0
      %582 = vmatprep.subr.mxu0 0.0
      %583 = vmatpush2.msra.mxu0 0.0
      %584 = vmatprep.subr.mxu0 0.0
      %585 = vmatpush2.msra.mxu0 0.0
      %586 = vmatprep.subr.mxu0 0.0
      %587 = vmatpush2.msra.mxu0 0.0
      %588 = vmatprep.subr.mxu0 0.0
      %589 = vmatpush2.msra.mxu0 0.0
      %590 = vmatprep.subr.mxu0 0.0
      %591 = vmatpush2.msra.mxu0 0.0
      %592 = vmatprep.subr.mxu0 0.0
      %593 = vmatpush2.msra.mxu0 0.0
      %594 = vmatprep.subr.mxu0 0.0
      %595 = vmatpush2.msra.mxu0 0.0
      %596 = vmatprep.subr.mxu0 0.0
      %597 = vmatpush2.msra.mxu0 0.0
      %598 = vmatprep.subr.mxu0 0.0
      %599 = vmatpush2.msra.mxu0 0.0
      %600 = vmatprep.subr.mxu0 0.0
      %601 = vmatpush2.msra.mxu0 0.0
      %602 = vmatprep.subr.mxu0 0.0
      %603 = vmatpush2.msra.mxu0 0.0
      %604 = vmatprep.mubr.f32.mxu0 0.0
      %605 = vmatmul.mubr.f32.gmra.mxu0 %v529
      %v606 = vpop.f32.mrf.mxu0
      %v607 = vadd.f32 0.0, %v606
      %v608 = vpop.f32.mrf.mxu0
      %v609 = vadd.f32 0.0, %v608
      %610 = vmatprep.mubr.f32.mxu0 0.0
      %611 = vmatmul.mubr.f32.gmra.mxu0 %v532
      %v612 = vpop.f32.mrf.mxu0
      %v613 = vadd.f32 0.0, %v612
      %v614 = vpop.f32.mrf.mxu0
      %v615 = vadd.f32 0.0, %v614
      %616 = vmatprep.mubr.f32.mxu0 0.0
      %617 = vmatmul.mubr.f32.gmra.mxu0 %v535
      %v618 = vpop.f32.mrf.mxu0
      %v619 = vadd.f32 0.0, %v618
      %v620 = vpop.f32.mrf.mxu0
      %v621 = vadd.f32 0.0, %v620
      %622 = vmatprep.mubr.f32.mxu0 0.0
      %623 = vmatmul.mubr.f32.gmra.mxu0 %v538
      %v624 = vpop.f32.mrf.mxu0
      %v625 = vadd.f32 0.0, %v624
      %v626 = vpop.f32.mrf.mxu0
      %v627 = vadd.f32 0.0, %v626
      %628 = vdwg.mxu0
      %v629 = vadd.f32 %v465, %v607
      %v630 = vadd.f32 %v467, %v609
      %v631 = vadd.f32 %v471, %v613
      %v632 = vadd.f32 %v473, %v615
      %v633 = vadd.f32 %v477, %v619
      %v634 = vadd.f32 %v479, %v621
      %v635 = vadd.f32 %v483, %v625
      %v636 = vadd.f32 %v485, %v627
      %637 = vrot.lane.b32.xlu0 %v219, 112
      %v638 = vpop.permute.xlu0 %637
      %639 = vrot.lane.b32.xlu0 %v220, 112
      %v640 = vpop.permute.xlu0 %639
      %641 = vrot.lane.b32.xlu0 %v221, 112
      %v642 = vpop.permute.xlu0 %641
      %643 = vrot.lane.b32.xlu0 %v222, 112
      %v644 = vpop.permute.xlu0 %643
      %645 = vrot.lane.b32.xlu0 %v223, 112
      %v646 = vpop.permute.xlu0 %645
      %647 = vrot.lane.b32.xlu0 %v224, 112
      %v648 = vpop.permute.xlu0 %647
      %649 = vrot.lane.b32.xlu0 %v225, 112
      %v650 = vpop.permute.xlu0 %649
      %651 = vrot.lane.b32.xlu0 %v226, 112
      %v652 = vpop.permute.xlu0 %651
      %653 = vrot.lane.b32.xlu0 %v227, 112
      %v654 = vpop.permute.xlu0 %653
      %655 = vrot.lane.b32.xlu0 %v228, 112
      %v656 = vpop.permute.xlu0 %655
      %657 = vrot.lane.b32.xlu0 %v229, 112
      %v658 = vpop.permute.xlu0 %657
      %659 = vrot.lane.b32.xlu0 %v230, 112
      %v660 = vpop.permute.xlu0 %659
      %vm661 = vcmask 916480
      %v662 = vsel %vm661, %v638, %v640
      %v663 = vsel %vm661, %v640, %v642
      %v664 = vsel %vm661, %v644, %v646
      %v665 = vsel %vm661, %v646, %v648
      %v666 = vsel %vm661, %v650, %v652
      %v667 = vsel %vm661, %v652, %v654
      %v668 = vsel %vm661, %v656, %v658
      %v669 = vsel %vm661, %v658, %v660
      %v679 = vsel %vm284, %v183, 0
      %v682 = vsel %vm284, %v184, 0
      %v685 = vsel %vm284, %v185, 0
      %v688 = vsel %vm284, %v186, 0
      %690 = vmatprep.subr.mxu0 0.0
      %691 = vmatpush1.msra.mxu0 0.0
      %692 = vmatprep.subr.mxu0 0.0
      %693 = vmatpush1.msra.mxu0 0.0
      %694 = vmatprep.subr.mxu0 0.0
      %695 = vmatpush1.msra.mxu0 0.0
      %696 = vmatprep.subr.mxu0 0.0
      %697 = vmatpush1.msra.mxu0 0.0
      %698 = vmatprep.subr.mxu0 0.0
      %699 = vmatpush1.msra.mxu0 0.0
      %700 = vmatprep.subr.mxu0 0.0
      %701 = vmatpush1.msra.mxu0 0.0
      %702 = vmatprep.subr.mxu0 0.0
      %703 = vmatpush1.msra.mxu0 0.0
      %704 = vmatprep.subr.mxu0 0.0
      %705 = vmatpush1.msra.mxu0 0.0
      %706 = vmatprep.subr.mxu0 0.0
      %707 = vmatpush1.msra.mxu0 0.0
      %708 = vmatprep.subr.mxu0 0.0
      %709 = vmatpush1.msra.mxu0 0.0
      %710 = vmatprep.subr.mxu0 0.0
      %711 = vmatpush1.msra.mxu0 0.0
      %712 = vmatprep.subr.mxu0 0.0
      %713 = vmatpush1.msra.mxu0 0.0
      %714 = vmatprep.subr.mxu0 %v669
      %715 = vmatpush1.msra.mxu0 %v668
      %716 = vmatprep.subr.mxu0 %v667
      %717 = vmatpush1.msra.mxu0 %v666
      %718 = vmatprep.subr.mxu0 %v665
      %719 = vmatpush1.msra.mxu0 %v664
      %720 = vmatprep.subr.mxu0 %v663
      %721 = vmatpush1.msra.mxu0 %v662
      %722 = vmatprep.subr.mxu0 0.0
      %723 = vmatpush2.msra.mxu0 0.0
      %724 = vmatprep.subr.mxu0 0.0
      %725 = vmatpush2.msra.mxu0 0.0
      %726 = vmatprep.subr.mxu0 0.0
      %727 = vmatpush2.msra.mxu0 0.0
      %728 = vmatprep.subr.mxu0 0.0
      %729 = vmatpush2.msra.mxu0 0.0
      %730 = vmatprep.subr.mxu0 0.0
      %731 = vmatpush2.msra.mxu0 0.0
      %732 = vmatprep.subr.mxu0 0.0
      %733 = vmatpush2.msra.mxu0 0.0
      %734 = vmatprep.subr.mxu0 0.0
      %735 = vmatpush2.msra.mxu0 0.0
      %736 = vmatprep.subr.mxu0 0.0
      %737 = vmatpush2.msra.mxu0 0.0
      %738 = vmatprep.subr.mxu0 0.0
      %739 = vmatpush2.msra.mxu0 0.0
      %740 = vmatprep.subr.mxu0 0.0
      %741 = vmatpush2.msra.mxu0 0.0
      %742 = vmatprep.subr.mxu0 0.0
      %743 = vmatpush2.msra.mxu0 0.0
      %744 = vmatprep.subr.mxu0 0.0
      %745 = vmatpush2.msra.mxu0 0.0
      %746 = vmatprep.subr.mxu0 0.0
      %747 = vmatpush2.msra.mxu0 0.0
      %748 = vmatprep.subr.mxu0 0.0
      %749 = vmatpush2.msra.mxu0 0.0
      %750 = vmatprep.subr.mxu0 0.0
      %751 = vmatpush2.msra.mxu0 0.0
      %752 = vmatprep.subr.mxu0 0.0
      %753 = vmatpush2.msra.mxu0 0.0
      %754 = vmatprep.mubr.f32.mxu0 0.0
      %755 = vmatmul.mubr.f32.gmra.mxu0 %v679
      %v756 = vpop.f32.mrf.mxu0
      %v757 = vadd.f32 0.0, %v756
      %v758 = vpop.f32.mrf.mxu0
      %v759 = vadd.f32 0.0, %v758
      %760 = vmatprep.mubr.f32.mxu0 0.0
      %761 = vmatmul.mubr.f32.gmra.mxu0 %v682
      %v762 = vpop.f32.mrf.mxu0
      %v763 = vadd.f32 0.0, %v762
      %v764 = vpop.f32.mrf.mxu0
      %v765 = vadd.f32 0.0, %v764
      %766 = vmatprep.mubr.f32.mxu0 0.0
      %767 = vmatmul.mubr.f32.gmra.mxu0 %v685
      %v768 = vpop.f32.mrf.mxu0
      %v769 = vadd.f32 0.0, %v768
      %v770 = vpop.f32.mrf.mxu0
      %v771 = vadd.f32 0.0, %v770
      %772 = vmatprep.mubr.f32.mxu0 0.0
      %773 = vmatmul.mubr.f32.gmra.mxu0 %v688
      %v774 = vpop.f32.mrf.mxu0
      %v775 = vadd.f32 0.0, %v774
      %v776 = vpop.f32.mrf.mxu0
      %v777 = vadd.f32 0.0, %v776
      %778 = vdwg.mxu0
      %v779 = vadd.f32 %v629, %v757
      %v780 = vadd.f32 %v630, %v759
      %v781 = vadd.f32 %v631, %v763
      %v782 = vadd.f32 %v632, %v765
      %v783 = vadd.f32 %v633, %v769
      %v784 = vadd.f32 %v634, %v771
      %v785 = vadd.f32 %v635, %v775
      %v786 = vadd.f32 %v636, %v777
      %787 = vrot.lane.b32.xlu0 %v219, 111
      %v788 = vpop.permute.xlu0 %787
      %789 = vrot.lane.b32.xlu0 %v220, 111
      %v790 = vpop.permute.xlu0 %789
      %791 = vrot.lane.b32.xlu0 %v221, 111
      %v792 = vpop.permute.xlu0 %791
      %793 = vrot.lane.b32.xlu0 %v222, 111
      %v794 = vpop.permute.xlu0 %793
      %795 = vrot.lane.b32.xlu0 %v223, 111
      %v796 = vpop.permute.xlu0 %795
      %797 = vrot.lane.b32.xlu0 %v224, 111
      %v798 = vpop.permute.xlu0 %797
      %799 = vrot.lane.b32.xlu0 %v225, 111
      %v800 = vpop.permute.xlu0 %799
      %801 = vrot.lane.b32.xlu0 %v226, 111
      %v802 = vpop.permute.xlu0 %801
      %803 = vrot.lane.b32.xlu0 %v227, 111
      %v804 = vpop.permute.xlu0 %803
      %805 = vrot.lane.b32.xlu0 %v228, 111
      %v806 = vpop.permute.xlu0 %805
      %807 = vrot.lane.b32.xlu0 %v229, 111
      %v808 = vpop.permute.xlu0 %807
      %809 = vrot.lane.b32.xlu0 %v230, 111
      %v810 = vpop.permute.xlu0 %809
      %vm811 = vcmask 908288
      %v812 = vsel %vm811, %v788, %v790
      %v813 = vsel %vm811, %v790, %v792
      %v814 = vsel %vm811, %v794, %v796
      %v815 = vsel %vm811, %v796, %v798
      %v816 = vsel %vm811, %v800, %v802
      %v817 = vsel %vm811, %v802, %v804
      %v818 = vsel %vm811, %v806, %v808
      %v819 = vsel %vm811, %v808, %v810
      %v829 = vsel %vm284, %v187, 0
      %v832 = vsel %vm284, %v188, 0
      %v835 = vsel %vm284, %v189, 0
      %v838 = vsel %vm284, %v190, 0
      %840 = vmatprep.subr.mxu0 0.0
      %841 = vmatpush1.msra.mxu0 0.0
      %842 = vmatprep.subr.mxu0 0.0
      %843 = vmatpush1.msra.mxu0 0.0
      %844 = vmatprep.subr.mxu0 0.0
      %845 = vmatpush1.msra.mxu0 0.0
      %846 = vmatprep.subr.mxu0 0.0
      %847 = vmatpush1.msra.mxu0 0.0
      %848 = vmatprep.subr.mxu0 0.0
      %849 = vmatpush1.msra.mxu0 0.0
      %850 = vmatprep.subr.mxu0 0.0
      %851 = vmatpush1.msra.mxu0 0.0
      %852 = vmatprep.subr.mxu0 0.0
      %853 = vmatpush1.msra.mxu0 0.0
      %854 = vmatprep.subr.mxu0 0.0
      %855 = vmatpush1.msra.mxu0 0.0
      %856 = vmatprep.subr.mxu0 0.0
      %857 = vmatpush1.msra.mxu0 0.0
      %858 = vmatprep.subr.mxu0 0.0
      %859 = vmatpush1.msra.mxu0 0.0
      %860 = vmatprep.subr.mxu0 0.0
      %861 = vmatpush1.msra.mxu0 0.0
      %862 = vmatprep.subr.mxu0 0.0
      %863 = vmatpush1.msra.mxu0 0.0
      %864 = vmatprep.subr.mxu0 %v819
      %865 = vmatpush1.msra.mxu0 %v818
      %866 = vmatprep.subr.mxu0 %v817
      %867 = vmatpush1.msra.mxu0 %v816
      %868 = vmatprep.subr.mxu0 %v815
      %869 = vmatpush1.msra.mxu0 %v814
      %870 = vmatprep.subr.mxu0 %v813
      %871 = vmatpush1.msra.mxu0 %v812
      %872 = vmatprep.subr.mxu0 0.0
      %873 = vmatpush2.msra.mxu0 0.0
      %874 = vmatprep.subr.mxu0 0.0
      %875 = vmatpush2.msra.mxu0 0.0
      %876 = vmatprep.subr.mxu0 0.0
      %877 = vmatpush2.msra.mxu0 0.0
      %878 = vmatprep.subr.mxu0 0.0
      %879 = vmatpush2.msra.mxu0 0.0
      %880 = vmatprep.subr.mxu0 0.0
      %881 = vmatpush2.msra.mxu0 0.0
      %882 = vmatprep.subr.mxu0 0.0
      %883 = vmatpush2.msra.mxu0 0.0
      %884 = vmatprep.subr.mxu0 0.0
      %885 = vmatpush2.msra.mxu0 0.0
      %886 = vmatprep.subr.mxu0 0.0
      %887 = vmatpush2.msra.mxu0 0.0
      %888 = vmatprep.subr.mxu0 0.0
      %889 = vmatpush2.msra.mxu0 0.0
      %890 = vmatprep.subr.mxu0 0.0
      %891 = vmatpush2.msra.mxu0 0.0
      %892 = vmatprep.subr.mxu0 0.0
      %893 = vmatpush2.msra.mxu0 0.0
      %894 = vmatprep.subr.mxu0 0.0
      %895 = vmatpush2.msra.mxu0 0.0
      %896 = vmatprep.subr.mxu0 0.0
      %897 = vmatpush2.msra.mxu0 0.0
      %898 = vmatprep.subr.mxu0 0.0
      %899 = vmatpush2.msra.mxu0 0.0
      %900 = vmatprep.subr.mxu0 0.0
      %901 = vmatpush2.msra.mxu0 0.0
      %902 = vmatprep.subr.mxu0 0.0
      %903 = vmatpush2.msra.mxu0 0.0
      %904 = vmatprep.mubr.f32.mxu0 0.0
      %905 = vmatmul.mubr.f32.gmra.mxu0 %v829
      %v906 = vpop.f32.mrf.mxu0
      %v907 = vadd.f32 0.0, %v906
      %v908 = vpop.f32.mrf.mxu0
      %v909 = vadd.f32 0.0, %v908
      %910 = vmatprep.mubr.f32.mxu0 0.0
      %911 = vmatmul.mubr.f32.gmra.mxu0 %v832
      %v912 = vpop.f32.mrf.mxu0
      %v913 = vadd.f32 0.0, %v912
      %v914 = vpop.f32.mrf.mxu0
      %v915 = vadd.f32 0.0, %v914
      %916 = vmatprep.mubr.f32.mxu0 0.0
      %917 = vmatmul.mubr.f32.gmra.mxu0 %v835
      %v918 = vpop.f32.mrf.mxu0
      %v919 = vadd.f32 0.0, %v918
      %v920 = vpop.f32.mrf.mxu0
      %v921 = vadd.f32 0.0, %v920
      %922 = vmatprep.mubr.f32.mxu0 0.0
      %923 = vmatmul.mubr.f32.gmra.mxu0 %v838
      %v924 = vpop.f32.mrf.mxu0
      %v925 = vadd.f32 0.0, %v924
      %v926 = vpop.f32.mrf.mxu0
      %v927 = vadd.f32 0.0, %v926
      %928 = vdwg.mxu0
      %v929 = vadd.f32 %v779, %v907
      %v930 = vadd.f32 %v780, %v909
      %v931 = vadd.f32 %v781, %v913
      %v932 = vadd.f32 %v782, %v915
      %v933 = vadd.f32 %v783, %v919
      %v934 = vadd.f32 %v784, %v921
      %v935 = vadd.f32 %v785, %v925
      %v936 = vadd.f32 %v786, %v927
      %937 = vrot.lane.b32.xlu0 %v219, 110
      %v938 = vpop.permute.xlu0 %937
      %939 = vrot.lane.b32.xlu0 %v220, 110
      %v940 = vpop.permute.xlu0 %939
      %941 = vrot.lane.b32.xlu0 %v221, 110
      %v942 = vpop.permute.xlu0 %941
      %943 = vrot.lane.b32.xlu0 %v222, 110
      %v944 = vpop.permute.xlu0 %943
      %945 = vrot.lane.b32.xlu0 %v223, 110
      %v946 = vpop.permute.xlu0 %945
      %947 = vrot.lane.b32.xlu0 %v224, 110
      %v948 = vpop.permute.xlu0 %947
      %949 = vrot.lane.b32.xlu0 %v225, 110
      %v950 = vpop.permute.xlu0 %949
      %951 = vrot.lane.b32.xlu0 %v226, 110
      %v952 = vpop.permute.xlu0 %951
      %953 = vrot.lane.b32.xlu0 %v227, 110
      %v954 = vpop.permute.xlu0 %953
      %955 = vrot.lane.b32.xlu0 %v228, 110
      %v956 = vpop.permute.xlu0 %955
      %957 = vrot.lane.b32.xlu0 %v229, 110
      %v958 = vpop.permute.xlu0 %957
      %959 = vrot.lane.b32.xlu0 %v230, 110
      %v960 = vpop.permute.xlu0 %959
      %vm961 = vcmask 900096
      %v962 = vsel %vm961, %v938, %v940
      %v963 = vsel %vm961, %v940, %v942
      %v964 = vsel %vm961, %v944, %v946
      %v965 = vsel %vm961, %v946, %v948
      %v966 = vsel %vm961, %v950, %v952
      %v967 = vsel %vm961, %v952, %v954
      %v968 = vsel %vm961, %v956, %v958
      %v969 = vsel %vm961, %v958, %v960
      %v979 = vsel %vm284, %v191, 0
      %v982 = vsel %vm284, %v192, 0
      %v985 = vsel %vm284, %v193, 0
      %v988 = vsel %vm284, %v194, 0
      %990 = vmatprep.subr.mxu0 0.0
      %991 = vmatpush1.msra.mxu0 0.0
      %992 = vmatprep.subr.mxu0 0.0
      %993 = vmatpush1.msra.mxu0 0.0
      %994 = vmatprep.subr.mxu0 0.0
      %995 = vmatpush1.msra.mxu0 0.0
      %996 = vmatprep.subr.mxu0 0.0
      %997 = vmatpush1.msra.mxu0 0.0
      %998 = vmatprep.subr.mxu0 0.0
      %999 = vmatpush1.msra.mxu0 0.0
      %1000 = vmatprep.subr.mxu0 0.0
      %1001 = vmatpush1.msra.mxu0 0.0
      %1002 = vmatprep.subr.mxu0 0.0
      %1003 = vmatpush1.msra.mxu0 0.0
      %1004 = vmatprep.subr.mxu0 0.0
      %1005 = vmatpush1.msra.mxu0 0.0
      %1006 = vmatprep.subr.mxu0 0.0
      %1007 = vmatpush1.msra.mxu0 0.0
      %1008 = vmatprep.subr.mxu0 0.0
      %1009 = vmatpush1.msra.mxu0 0.0
      %1010 = vmatprep.subr.mxu0 0.0
      %1011 = vmatpush1.msra.mxu0 0.0
      %1012 = vmatprep.subr.mxu0 0.0
      %1013 = vmatpush1.msra.mxu0 0.0
      %1014 = vmatprep.subr.mxu0 %v969
      %1015 = vmatpush1.msra.mxu0 %v968
      %1016 = vmatprep.subr.mxu0 %v967
      %1017 = vmatpush1.msra.mxu0 %v966
      %1018 = vmatprep.subr.mxu0 %v965
      %1019 = vmatpush1.msra.mxu0 %v964
      %1020 = vmatprep.subr.mxu0 %v963
      %1021 = vmatpush1.msra.mxu0 %v962
      %1022 = vmatprep.subr.mxu0 0.0
      %1023 = vmatpush2.msra.mxu0 0.0
      %1024 = vmatprep.subr.mxu0 0.0
      %1025 = vmatpush2.msra.mxu0 0.0
      %1026 = vmatprep.subr.mxu0 0.0
      %1027 = vmatpush2.msra.mxu0 0.0
      %1028 = vmatprep.subr.mxu0 0.0
      %1029 = vmatpush2.msra.mxu0 0.0
      %1030 = vmatprep.subr.mxu0 0.0
      %1031 = vmatpush2.msra.mxu0 0.0
      %1032 = vmatprep.subr.mxu0 0.0
      %1033 = vmatpush2.msra.mxu0 0.0
      %1034 = vmatprep.subr.mxu0 0.0
      %1035 = vmatpush2.msra.mxu0 0.0
      %1036 = vmatprep.subr.mxu0 0.0
      %1037 = vmatpush2.msra.mxu0 0.0
      %1038 = vmatprep.subr.mxu0 0.0
      %1039 = vmatpush2.msra.mxu0 0.0
      %1040 = vmatprep.subr.mxu0 0.0
      %1041 = vmatpush2.msra.mxu0 0.0
      %1042 = vmatprep.subr.mxu0 0.0
      %1043 = vmatpush2.msra.mxu0 0.0
      %1044 = vmatprep.subr.mxu0 0.0
      %1045 = vmatpush2.msra.mxu0 0.0
      %1046 = vmatprep.subr.mxu0 0.0
      %1047 = vmatpush2.msra.mxu0 0.0
      %1048 = vmatprep.subr.mxu0 0.0
      %1049 = vmatpush2.msra.mxu0 0.0
      %1050 = vmatprep.subr.mxu0 0.0
      %1051 = vmatpush2.msra.mxu0 0.0
      %1052 = vmatprep.subr.mxu0 0.0
      %1053 = vmatpush2.msra.mxu0 0.0
      %1054 = vmatprep.mubr.f32.mxu0 0.0
      %1055 = vmatmul.mubr.f32.gmra.mxu0 %v979
      %v1056 = vpop.f32.mrf.mxu0
      %v1057 = vadd.f32 0.0, %v1056
      %v1058 = vpop.f32.mrf.mxu0
      %v1059 = vadd.f32 0.0, %v1058
      %1060 = vmatprep.mubr.f32.mxu0 0.0
      %1061 = vmatmul.mubr.f32.gmra.mxu0 %v982
      %v1062 = vpop.f32.mrf.mxu0
      %v1063 = vadd.f32 0.0, %v1062
      %v1064 = vpop.f32.mrf.mxu0
      %v1065 = vadd.f32 0.0, %v1064
      %1066 = vmatprep.mubr.f32.mxu0 0.0
      %1067 = vmatmul.mubr.f32.gmra.mxu0 %v985
      %v1068 = vpop.f32.mrf.mxu0
      %v1069 = vadd.f32 0.0, %v1068
      %v1070 = vpop.f32.mrf.mxu0
      %v1071 = vadd.f32 0.0, %v1070
      %1072 = vmatprep.mubr.f32.mxu0 0.0
      %1073 = vmatmul.mubr.f32.gmra.mxu0 %v988
      %v1074 = vpop.f32.mrf.mxu0
      %v1075 = vadd.f32 0.0, %v1074
      %v1076 = vpop.f32.mrf.mxu0
      %v1077 = vadd.f32 0.0, %v1076
      %1078 = vdwg.mxu0
      %v1079 = vadd.f32 %v929, %v1057
      %v1080 = vadd.f32 %v930, %v1059
      %v1081 = vadd.f32 %v931, %v1063
      %v1082 = vadd.f32 %v932, %v1065
      %v1083 = vadd.f32 %v933, %v1069
      %v1084 = vadd.f32 %v934, %v1071
      %v1085 = vadd.f32 %v935, %v1075
      %v1086 = vadd.f32 %v936, %v1077
      %1087 = vrot.lane.b32.xlu0 %v219, 96
      %v1088 = vpop.permute.xlu0 %1087
      %1089 = vrot.lane.b32.xlu0 %v220, 96
      %v1090 = vpop.permute.xlu0 %1089
      %1091 = vrot.lane.b32.xlu0 %v221, 96
      %v1092 = vpop.permute.xlu0 %1091
      %1093 = vrot.lane.b32.xlu0 %v222, 96
      %v1094 = vpop.permute.xlu0 %1093
      %1095 = vrot.lane.b32.xlu0 %v223, 96
      %v1096 = vpop.permute.xlu0 %1095
      %1097 = vrot.lane.b32.xlu0 %v224, 96
      %v1098 = vpop.permute.xlu0 %1097
      %1099 = vrot.lane.b32.xlu0 %v225, 96
      %v1100 = vpop.permute.xlu0 %1099
      %1101 = vrot.lane.b32.xlu0 %v226, 96
      %v1102 = vpop.permute.xlu0 %1101
      %1103 = vrot.lane.b32.xlu0 %v227, 96
      %v1104 = vpop.permute.xlu0 %1103
      %1105 = vrot.lane.b32.xlu0 %v228, 96
      %v1106 = vpop.permute.xlu0 %1105
      %1107 = vrot.lane.b32.xlu0 %v229, 96
      %v1108 = vpop.permute.xlu0 %1107
      %1109 = vrot.lane.b32.xlu0 %v230, 96
      %v1110 = vpop.permute.xlu0 %1109
      %vm1111 = vcmask 785408
      %v1112 = vsel %vm1111, %v1088, %v1090
      %v1113 = vsel %vm1111, %v1090, %v1092
      %v1114 = vsel %vm1111, %v1094, %v1096
      %v1115 = vsel %vm1111, %v1096, %v1098
      %v1116 = vsel %vm1111, %v1100, %v1102
      %v1117 = vsel %vm1111, %v1102, %v1104
      %v1118 = vsel %vm1111, %v1106, %v1108
      %v1119 = vsel %vm1111, %v1108, %v1110
      %v1129 = vsel %vm284, %v195, 0
      %v1132 = vsel %vm284, %v196, 0
      %v1135 = vsel %vm284, %v197, 0
      %v1138 = vsel %vm284, %v198, 0
      %1140 = vmatprep.subr.mxu0 0.0
      %1141 = vmatpush1.msra.mxu0 0.0
      %1142 = vmatprep.subr.mxu0 0.0
      %1143 = vmatpush1.msra.mxu0 0.0
      %1144 = vmatprep.subr.mxu0 0.0
      %1145 = vmatpush1.msra.mxu0 0.0
      %1146 = vmatprep.subr.mxu0 0.0
      %1147 = vmatpush1.msra.mxu0 0.0
      %1148 = vmatprep.subr.mxu0 0.0
      %1149 = vmatpush1.msra.mxu0 0.0
      %1150 = vmatprep.subr.mxu0 0.0
      %1151 = vmatpush1.msra.mxu0 0.0
      %1152 = vmatprep.subr.mxu0 0.0
      %1153 = vmatpush1.msra.mxu0 0.0
      %1154 = vmatprep.subr.mxu0 0.0
      %1155 = vmatpush1.msra.mxu0 0.0
      %1156 = vmatprep.subr.mxu0 0.0
      %1157 = vmatpush1.msra.mxu0 0.0
      %1158 = vmatprep.subr.mxu0 0.0
      %1159 = vmatpush1.msra.mxu0 0.0
      %1160 = vmatprep.subr.mxu0 0.0
      %1161 = vmatpush1.msra.mxu0 0.0
      %1162 = vmatprep.subr.mxu0 0.0
      %1163 = vmatpush1.msra.mxu0 0.0
      %1164 = vmatprep.subr.mxu0 %v1119
      %1165 = vmatpush1.msra.mxu0 %v1118
      %1166 = vmatprep.subr.mxu0 %v1117
      %1167 = vmatpush1.msra.mxu0 %v1116
      %1168 = vmatprep.subr.mxu0 %v1115
      %1169 = vmatpush1.msra.mxu0 %v1114
      %1170 = vmatprep.subr.mxu0 %v1113
      %1171 = vmatpush1.msra.mxu0 %v1112
      %1172 = vmatprep.subr.mxu0 0.0
      %1173 = vmatpush2.msra.mxu0 0.0
      %1174 = vmatprep.subr.mxu0 0.0
      %1175 = vmatpush2.msra.mxu0 0.0
      %1176 = vmatprep.subr.mxu0 0.0
      %1177 = vmatpush2.msra.mxu0 0.0
      %1178 = vmatprep.subr.mxu0 0.0
      %1179 = vmatpush2.msra.mxu0 0.0
      %1180 = vmatprep.subr.mxu0 0.0
      %1181 = vmatpush2.msra.mxu0 0.0
      %1182 = vmatprep.subr.mxu0 0.0
      %1183 = vmatpush2.msra.mxu0 0.0
      %1184 = vmatprep.subr.mxu0 0.0
      %1185 = vmatpush2.msra.mxu0 0.0
      %1186 = vmatprep.subr.mxu0 0.0
      %1187 = vmatpush2.msra.mxu0 0.0
      %1188 = vmatprep.subr.mxu0 0.0
      %1189 = vmatpush2.msra.mxu0 0.0
      %1190 = vmatprep.subr.mxu0 0.0
      %1191 = vmatpush2.msra.mxu0 0.0
      %1192 = vmatprep.subr.mxu0 0.0
      %1193 = vmatpush2.msra.mxu0 0.0
      %1194 = vmatprep.subr.mxu0 0.0
      %1195 = vmatpush2.msra.mxu0 0.0
      %1196 = vmatprep.subr.mxu0 0.0
      %1197 = vmatpush2.msra.mxu0 0.0
      %1198 = vmatprep.subr.mxu0 0.0
      %1199 = vmatpush2.msra.mxu0 0.0
      %1200 = vmatprep.subr.mxu0 0.0
      %1201 = vmatpush2.msra.mxu0 0.0
      %1202 = vmatprep.subr.mxu0 0.0
      %1203 = vmatpush2.msra.mxu0 0.0
      %1204 = vmatprep.mubr.f32.mxu0 0.0
      %1205 = vmatmul.mubr.f32.gmra.mxu0 %v1129
      %v1206 = vpop.f32.mrf.mxu0
      %v1207 = vadd.f32 0.0, %v1206
      %v1208 = vpop.f32.mrf.mxu0
      %v1209 = vadd.f32 0.0, %v1208
      %1210 = vmatprep.mubr.f32.mxu0 0.0
      %1211 = vmatmul.mubr.f32.gmra.mxu0 %v1132
      %v1212 = vpop.f32.mrf.mxu0
      %v1213 = vadd.f32 0.0, %v1212
      %v1214 = vpop.f32.mrf.mxu0
      %v1215 = vadd.f32 0.0, %v1214
      %1216 = vmatprep.mubr.f32.mxu0 0.0
      %1217 = vmatmul.mubr.f32.gmra.mxu0 %v1135
      %v1218 = vpop.f32.mrf.mxu0
      %v1219 = vadd.f32 0.0, %v1218
      %v1220 = vpop.f32.mrf.mxu0
      %v1221 = vadd.f32 0.0, %v1220
      %1222 = vmatprep.mubr.f32.mxu0 0.0
      %1223 = vmatmul.mubr.f32.gmra.mxu0 %v1138
      %v1224 = vpop.f32.mrf.mxu0
      %v1225 = vadd.f32 0.0, %v1224
      %v1226 = vpop.f32.mrf.mxu0
      %v1227 = vadd.f32 0.0, %v1226
      %1228 = vdwg.mxu0
      %v1229 = vadd.f32 %v1079, %v1207
      %v1230 = vadd.f32 %v1080, %v1209
      %v1231 = vadd.f32 %v1081, %v1213
      %v1232 = vadd.f32 %v1082, %v1215
      %v1233 = vadd.f32 %v1083, %v1219
      %v1234 = vadd.f32 %v1084, %v1221
      %v1235 = vadd.f32 %v1085, %v1225
      %v1236 = vadd.f32 %v1086, %v1227
      %1237 = vrot.lane.b32.xlu0 %v219, 95
      %v1238 = vpop.permute.xlu0 %1237
      %1239 = vrot.lane.b32.xlu0 %v220, 95
      %v1240 = vpop.permute.xlu0 %1239
      %1241 = vrot.lane.b32.xlu0 %v221, 95
      %v1242 = vpop.permute.xlu0 %1241
      %1243 = vrot.lane.b32.xlu0 %v222, 95
      %v1244 = vpop.permute.xlu0 %1243
      %1245 = vrot.lane.b32.xlu0 %v223, 95
      %v1246 = vpop.permute.xlu0 %1245
      %1247 = vrot.lane.b32.xlu0 %v224, 95
      %v1248 = vpop.permute.xlu0 %1247
      %1249 = vrot.lane.b32.xlu0 %v225, 95
      %v1250 = vpop.permute.xlu0 %1249
      %1251 = vrot.lane.b32.xlu0 %v226, 95
      %v1252 = vpop.permute.xlu0 %1251
      %1253 = vrot.lane.b32.xlu0 %v227, 95
      %v1254 = vpop.permute.xlu0 %1253
      %1255 = vrot.lane.b32.xlu0 %v228, 95
      %v1256 = vpop.permute.xlu0 %1255
      %1257 = vrot.lane.b32.xlu0 %v229, 95
      %v1258 = vpop.permute.xlu0 %1257
      %1259 = vrot.lane.b32.xlu0 %v230, 95
      %v1260 = vpop.permute.xlu0 %1259
      %vm1261 = vcmask 777216
      %v1262 = vsel %vm1261, %v1238, %v1240
      %v1263 = vsel %vm1261, %v1240, %v1242
      %v1264 = vsel %vm1261, %v1244, %v1246
      %v1265 = vsel %vm1261, %v1246, %v1248
      %v1266 = vsel %vm1261, %v1250, %v1252
      %v1267 = vsel %vm1261, %v1252, %v1254
      %v1268 = vsel %vm1261, %v1256, %v1258
      %v1269 = vsel %vm1261, %v1258, %v1260
      %v1279 = vsel %vm284, %v199, 0
      %v1282 = vsel %vm284, %v200, 0
      %v1285 = vsel %vm284, %v201, 0
      %v1288 = vsel %vm284, %v202, 0
      %1290 = vmatprep.subr.mxu0 0.0
      %1291 = vmatpush1.msra.mxu0 0.0
      %1292 = vmatprep.subr.mxu0 0.0
      %1293 = vmatpush1.msra.mxu0 0.0
      %1294 = vmatprep.subr.mxu0 0.0
      %1295 = vmatpush1.msra.mxu0 0.0
      %1296 = vmatprep.subr.mxu0 0.0
      %1297 = vmatpush1.msra.mxu0 0.0
      %1298 = vmatprep.subr.mxu0 0.0
      %1299 = vmatpush1.msra.mxu0 0.0
      %1300 = vmatprep.subr.mxu0 0.0
      %1301 = vmatpush1.msra.mxu0 0.0
      %1302 = vmatprep.subr.mxu0 0.0
      %1303 = vmatpush1.msra.mxu0 0.0
      %1304 = vmatprep.subr.mxu0 0.0
      %1305 = vmatpush1.msra.mxu0 0.0
      %1306 = vmatprep.subr.mxu0 0.0
      %1307 = vmatpush1.msra.mxu0 0.0
      %1308 = vmatprep.subr.mxu0 0.0
      %1309 = vmatpush1.msra.mxu0 0.0
      %1310 = vmatprep.subr.mxu0 0.0
      %1311 = vmatpush1.msra.mxu0 0.0
      %1312 = vmatprep.subr.mxu0 0.0
      %1313 = vmatpush1.msra.mxu0 0.0
      %1314 = vmatprep.subr.mxu0 %v1269
      %1315 = vmatpush1.msra.mxu0 %v1268
      %1316 = vmatprep.subr.mxu0 %v1267
      %1317 = vmatpush1.msra.mxu0 %v1266
      %1318 = vmatprep.subr.mxu0 %v1265
      %1319 = vmatpush1.msra.mxu0 %v1264
      %1320 = vmatprep.subr.mxu0 %v1263
      %1321 = vmatpush1.msra.mxu0 %v1262
      %1322 = vmatprep.subr.mxu0 0.0
      %1323 = vmatpush2.msra.mxu0 0.0
      %1324 = vmatprep.subr.mxu0 0.0
      %1325 = vmatpush2.msra.mxu0 0.0
      %1326 = vmatprep.subr.mxu0 0.0
      %1327 = vmatpush2.msra.mxu0 0.0
      %1328 = vmatprep.subr.mxu0 0.0
      %1329 = vmatpush2.msra.mxu0 0.0
      %1330 = vmatprep.subr.mxu0 0.0
      %1331 = vmatpush2.msra.mxu0 0.0
      %1332 = vmatprep.subr.mxu0 0.0
      %1333 = vmatpush2.msra.mxu0 0.0
      %1334 = vmatprep.subr.mxu0 0.0
      %1335 = vmatpush2.msra.mxu0 0.0
      %1336 = vmatprep.subr.mxu0 0.0
      %1337 = vmatpush2.msra.mxu0 0.0
      %1338 = vmatprep.subr.mxu0 0.0
      %1339 = vmatpush2.msra.mxu0 0.0
      %1340 = vmatprep.subr.mxu0 0.0
      %1341 = vmatpush2.msra.mxu0 0.0
      %1342 = vmatprep.subr.mxu0 0.0
      %1343 = vmatpush2.msra.mxu0 0.0
      %1344 = vmatprep.subr.mxu0 0.0
      %1345 = vmatpush2.msra.mxu0 0.0
      %1346 = vmatprep.subr.mxu0 0.0
      %1347 = vmatpush2.msra.mxu0 0.0
      %1348 = vmatprep.subr.mxu0 0.0
      %1349 = vmatpush2.msra.mxu0 0.0
      %1350 = vmatprep.subr.mxu0 0.0
      %1351 = vmatpush2.msra.mxu0 0.0
      %1352 = vmatprep.subr.mxu0 0.0
      %1353 = vmatpush2.msra.mxu0 0.0
      %1354 = vmatprep.mubr.f32.mxu0 0.0
      %1355 = vmatmul.mubr.f32.gmra.mxu0 %v1279
      %v1356 = vpop.f32.mrf.mxu0
      %v1357 = vadd.f32 0.0, %v1356
      %v1358 = vpop.f32.mrf.mxu0
      %v1359 = vadd.f32 0.0, %v1358
      %1360 = vmatprep.mubr.f32.mxu0 0.0
      %1361 = vmatmul.mubr.f32.gmra.mxu0 %v1282
      %v1362 = vpop.f32.mrf.mxu0
      %v1363 = vadd.f32 0.0, %v1362
      %v1364 = vpop.f32.mrf.mxu0
      %v1365 = vadd.f32 0.0, %v1364
      %1366 = vmatprep.mubr.f32.mxu0 0.0
      %1367 = vmatmul.mubr.f32.gmra.mxu0 %v1285
      %v1368 = vpop.f32.mrf.mxu0
      %v1369 = vadd.f32 0.0, %v1368
      %v1370 = vpop.f32.mrf.mxu0
      %v1371 = vadd.f32 0.0, %v1370
      %1372 = vmatprep.mubr.f32.mxu0 0.0
      %1373 = vmatmul.mubr.f32.gmra.mxu0 %v1288
      %v1374 = vpop.f32.mrf.mxu0
      %v1375 = vadd.f32 0.0, %v1374
      %v1376 = vpop.f32.mrf.mxu0
      %v1377 = vadd.f32 0.0, %v1376
      %1378 = vdwg.mxu0
      %v1379 = vadd.f32 %v1229, %v1357
      %v1380 = vadd.f32 %v1230, %v1359
      %v1381 = vadd.f32 %v1231, %v1363
      %v1382 = vadd.f32 %v1232, %v1365
      %v1383 = vadd.f32 %v1233, %v1369
      %v1384 = vadd.f32 %v1234, %v1371
      %v1385 = vadd.f32 %v1235, %v1375
      %v1386 = vadd.f32 %v1236, %v1377
      %1387 = vrot.lane.b32.xlu0 %v219, 94
      %v1388 = vpop.permute.xlu0 %1387
      %1389 = vrot.lane.b32.xlu0 %v220, 94
      %v1390 = vpop.permute.xlu0 %1389
      %1391 = vrot.lane.b32.xlu0 %v221, 94
      %v1392 = vpop.permute.xlu0 %1391
      %1393 = vrot.lane.b32.xlu0 %v222, 94
      %v1394 = vpop.permute.xlu0 %1393
      %1395 = vrot.lane.b32.xlu0 %v223, 94
      %v1396 = vpop.permute.xlu0 %1395
      %1397 = vrot.lane.b32.xlu0 %v224, 94
      %v1398 = vpop.permute.xlu0 %1397
      %1399 = vrot.lane.b32.xlu0 %v225, 94
      %v1400 = vpop.permute.xlu0 %1399
      %1401 = vrot.lane.b32.xlu0 %v226, 94
      %v1402 = vpop.permute.xlu0 %1401
      %1403 = vrot.lane.b32.xlu0 %v227, 94
      %v1404 = vpop.permute.xlu0 %1403
      %1405 = vrot.lane.b32.xlu0 %v228, 94
      %v1406 = vpop.permute.xlu0 %1405
      %1407 = vrot.lane.b32.xlu0 %v229, 94
      %v1408 = vpop.permute.xlu0 %1407
      %1409 = vrot.lane.b32.xlu0 %v230, 94
      %v1410 = vpop.permute.xlu0 %1409
      %vm1411 = vcmask 769024
      %v1412 = vsel %vm1411, %v1388, %v1390
      %v1413 = vsel %vm1411, %v1390, %v1392
      %v1414 = vsel %vm1411, %v1394, %v1396
      %v1415 = vsel %vm1411, %v1396, %v1398
      %v1416 = vsel %vm1411, %v1400, %v1402
      %v1417 = vsel %vm1411, %v1402, %v1404
      %v1418 = vsel %vm1411, %v1406, %v1408
      %v1419 = vsel %vm1411, %v1408, %v1410
      %v1429 = vsel %vm284, %v203, 0
      %v1432 = vsel %vm284, %v204, 0
      %v1435 = vsel %vm284, %v205, 0
      %v1438 = vsel %vm284, %v206, 0
      %1440 = vmatprep.subr.mxu0 0.0
      %1441 = vmatpush1.msra.mxu0 0.0
      %1442 = vmatprep.subr.mxu0 0.0
      %1443 = vmatpush1.msra.mxu0 0.0
      %1444 = vmatprep.subr.mxu0 0.0
      %1445 = vmatpush1.msra.mxu0 0.0
      %1446 = vmatprep.subr.mxu0 0.0
      %1447 = vmatpush1.msra.mxu0 0.0
      %1448 = vmatprep.subr.mxu0 0.0
      %1449 = vmatpush1.msra.mxu0 0.0
      %1450 = vmatprep.subr.mxu0 0.0
      %1451 = vmatpush1.msra.mxu0 0.0
      %1452 = vmatprep.subr.mxu0 0.0
      %1453 = vmatpush1.msra.mxu0 0.0
      %1454 = vmatprep.subr.mxu0 0.0
      %1455 = vmatpush1.msra.mxu0 0.0
      %1456 = vmatprep.subr.mxu0 0.0
      %1457 = vmatpush1.msra.mxu0 0.0
      %1458 = vmatprep.subr.mxu0 0.0
      %1459 = vmatpush1.msra.mxu0 0.0
      %1460 = vmatprep.subr.mxu0 0.0
      %1461 = vmatpush1.msra.mxu0 0.0
      %1462 = vmatprep.subr.mxu0 0.0
      %1463 = vmatpush1.msra.mxu0 0.0
      %1464 = vmatprep.subr.mxu0 %v1419
      %1465 = vmatpush1.msra.mxu0 %v1418
      %1466 = vmatprep.subr.mxu0 %v1417
      %1467 = vmatpush1.msra.mxu0 %v1416
      %1468 = vmatprep.subr.mxu0 %v1415
      %1469 = vmatpush1.msra.mxu0 %v1414
      %1470 = vmatprep.subr.mxu0 %v1413
      %1471 = vmatpush1.msra.mxu0 %v1412
      %1472 = vmatprep.subr.mxu0 0.0
      %1473 = vmatpush2.msra.mxu0 0.0
      %1474 = vmatprep.subr.mxu0 0.0
      %1475 = vmatpush2.msra.mxu0 0.0
      %1476 = vmatprep.subr.mxu0 0.0
      %1477 = vmatpush2.msra.mxu0 0.0
      %1478 = vmatprep.subr.mxu0 0.0
      %1479 = vmatpush2.msra.mxu0 0.0
      %1480 = vmatprep.subr.mxu0 0.0
      %1481 = vmatpush2.msra.mxu0 0.0
      %1482 = vmatprep.subr.mxu0 0.0
      %1483 = vmatpush2.msra.mxu0 0.0
      %1484 = vmatprep.subr.mxu0 0.0
      %1485 = vmatpush2.msra.mxu0 0.0
      %1486 = vmatprep.subr.mxu0 0.0
      %1487 = vmatpush2.msra.mxu0 0.0
      %1488 = vmatprep.subr.mxu0 0.0
      %1489 = vmatpush2.msra.mxu0 0.0
      %1490 = vmatprep.subr.mxu0 0.0
      %1491 = vmatpush2.msra.mxu0 0.0
      %1492 = vmatprep.subr.mxu0 0.0
      %1493 = vmatpush2.msra.mxu0 0.0
      %1494 = vmatprep.subr.mxu0 0.0
      %1495 = vmatpush2.msra.mxu0 0.0
      %1496 = vmatprep.subr.mxu0 0.0
      %1497 = vmatpush2.msra.mxu0 0.0
      %1498 = vmatprep.subr.mxu0 0.0
      %1499 = vmatpush2.msra.mxu0 0.0
      %1500 = vmatprep.subr.mxu0 0.0
      %1501 = vmatpush2.msra.mxu0 0.0
      %1502 = vmatprep.subr.mxu0 0.0
      %1503 = vmatpush2.msra.mxu0 0.0
      %1504 = vmatprep.mubr.f32.mxu0 0.0
      %1505 = vmatmul.mubr.f32.gmra.mxu0 %v1429
      %v1506 = vpop.f32.mrf.mxu0
      %v1507 = vadd.f32 0.0, %v1506
      %v1508 = vpop.f32.mrf.mxu0
      %v1509 = vadd.f32 0.0, %v1508
      %1510 = vmatprep.mubr.f32.mxu0 0.0
      %1511 = vmatmul.mubr.f32.gmra.mxu0 %v1432
      %v1512 = vpop.f32.mrf.mxu0
      %v1513 = vadd.f32 0.0, %v1512
      %v1514 = vpop.f32.mrf.mxu0
      %v1515 = vadd.f32 0.0, %v1514
      %1516 = vmatprep.mubr.f32.mxu0 0.0
      %1517 = vmatmul.mubr.f32.gmra.mxu0 %v1435
      %v1518 = vpop.f32.mrf.mxu0
      %v1519 = vadd.f32 0.0, %v1518
      %v1520 = vpop.f32.mrf.mxu0
      %v1521 = vadd.f32 0.0, %v1520
      %1522 = vmatprep.mubr.f32.mxu0 0.0
      %1523 = vmatmul.mubr.f32.gmra.mxu0 %v1438
      %v1524 = vpop.f32.mrf.mxu0
      %v1525 = vadd.f32 0.0, %v1524
      %v1526 = vpop.f32.mrf.mxu0
      %v1527 = vadd.f32 0.0, %v1526
      %1528 = vdwg.mxu0
      %v1529 = vadd.f32 %v1379, %v1507
      %v1530 = vadd.f32 %v1380, %v1509
      %v1531 = vadd.f32 %v1381, %v1513
      %v1532 = vadd.f32 %v1382, %v1515
      %v1533 = vadd.f32 %v1383, %v1519
      %v1534 = vadd.f32 %v1384, %v1521
      %v1535 = vadd.f32 %v1385, %v1525
      %v1536 = vadd.f32 %v1386, %v1527
      %1538 = vset.pattern.permute.xlu0 0
      %1539 = vperm.xlu0 %1538, %v207
      %v1540 = vpop.permute.xlu0 %1539
      %1543 = vset.pattern.permute.xlu0 0
      %1544 = vperm.xlu0 %1543, %v208
      %v1545 = vpop.permute.xlu0 %1544
      %1548 = vset.pattern.permute.xlu0 0
      %1549 = vperm.xlu0 %1548, %v209
      %v1550 = vpop.permute.xlu0 %1549
      %1553 = vset.pattern.permute.xlu0 0
      %1554 = vperm.xlu0 %1553, %v210
      %v1555 = vpop.permute.xlu0 %1554
      %v1557 = vadd.f32 %v1529, %v1540
      %v1558 = vadd.f32 %v1530, %v1540
      %v1559 = vadd.f32 %v1531, %v1545
      %v1560 = vadd.f32 %v1532, %v1545
      %v1561 = vadd.f32 %v1533, %v1550
      %v1562 = vadd.f32 %v1534, %v1550
      %v1563 = vadd.f32 %v1535, %v1555
      %v1564 = vadd.f32 %v1536, %v1555
      %1565 = vst [vmem:[%s170] sm:$0xff] %v1557
      %1566 = vst [vmem:[%s170 + $0x8] sm:$0xff] %v1558
      %1567 = vst [vmem:[%s170 + $0x10] sm:$0xff] %v1559
      %1568 = vst [vmem:[%s170 + $0x18] sm:$0xff] %v1560
      %1569 = vst [vmem:[%s170 + $0x20] sm:$0xff] %v1561
      %1570 = vst [vmem:[%s170 + $0x28] sm:$0xff] %v1562
      %1571 = vst [vmem:[%s170 + $0x30] sm:$0xff] %v1563
      %1572 = vst [vmem:[%s170 + $0x38] sm:$0xff] %v1564
      %p1573 = scmp.lt.s32.totalorder %s14, 1
      %s1574 = scalar_select %p1573, %s14, 1
      %s1575 = smul.addr %s1574, 8
      %s1576 = smul.addr %s1575, 8
      %s1577 = scalar_lea.vmem %s3, %s1576
      // Predicated region
      $region33: #{capsules_forward.1} parent=31 // pred_check
        %p1578 = pneg %p100
      $region34: #{capsules_forward.1} parent=31 // pred_check_branch
        %1580 = sbr.rel (%p1578) target = $region36
      $region35: #{capsules_forward.1} parent=31 // pred_region
        _
      $region36: #{capsules_forward.1} parent=31 // pred_fallthru
        _
    $region32: #{capsules_forward.1} parent=5 // pred_fallthru
      _
    %p1581 = scmp.le.s32.totalorder 2, %s9
    // Predicated region
    $region37: #{capsules_forward.1} parent=5 // pred_check
      %p1582 = pneg %p1581
    $region38: #{capsules_forward.1} parent=5 // pred_check_branch
      %1584 = sbr.rel (%p1582) target = $region40
    $region39: #{capsules_forward.1} parent=5 // pred_region
      %s1585 = ssub.s32 %s9, 2
      // Predicated region
      $region41: #{capsules_forward.1} parent=39 // pred_check
        %p1586 = pneg %p106
      $region42: #{capsules_forward.1} parent=39 // pred_check_branch
        %1588 = sbr.rel (%p1586) target = $region44
      $region43: #{capsules_forward.1} parent=39 // pred_region
        %p1589 = scmp.lt.s32.totalorder %s15, 1
        %s1590 = scalar_select %p1589, %s15, 1
        %s1591 = smul.addr %s1590, 8
        %s1592 = smul.addr %s1591, 8
        %s1593 = scalar_lea.vmem %s3, %s1592
      $region44: #{capsules_forward.1} parent=39 // pred_fallthru
        _
    $region40: #{capsules_forward.1} parent=5 // pred_fallthru
      _
  $region6: #{capsules_forward.1} parent=0 // loop_footer
    %s13 = sadd.s32 1, %s9
  $region7: #{capsules_forward.1} parent=0 // loop_footer_branch
    %8 = sbr.rel target = $region3
  $region8: #{capsules_forward.1} parent=0 // loop_exit
    _

</llo_original>
